<compile_context>
chip_gen: v6e
topology: v6e:2x2x1
jax: 0.10.0
libtpu: 0.0.40
codegen_flags: <defaults>
</compile_context>

<pallas_src>
import functools

import jax
import jax.numpy as jnp
from jax.experimental import pallas as pl
from jax.experimental.pallas import tpu as pltpu

LANE = 128        # lane width: hidden (VMEM-only) dims padded to this
SUBLANE = 8       # sublane granularity for the batch tile
TB_MAX = 1024     # max batch-tile rows (amortizes per-grid-step overhead)

# If resident f32 weights would exceed this, store them as bf16 (f32 accumulation)
# so the "all layers resident" design still fits v7x's 64 MiB per-TC VMEM.
_BF16_WEIGHT_THRESHOLD_BYTES = 24 << 20
# TODO(synk): for models whose bf16-resident weights still exceed VMEM, stream
# weights per layer (extra 'arbitrary' grid axis or pltpu.emit_pipeline) instead.


def _round_up(x, m):
    return (x + m - 1) // m * m


def _supports_pipeline_mode():
    try:
        pl.BlockSpec((8, 128), lambda i: (0, 0), pipeline_mode=pl.Buffered(1))
        return True
    except (TypeError, AttributeError):
        return False


_HAS_PIPELINE_MODE = _supports_pipeline_mode()


def _resident_spec(shape):
    """Constant-index block (weights/biases): resident in VMEM, single-buffered."""
    if _HAS_PIPELINE_MODE:
        return pl.BlockSpec(shape, lambda i: (0, 0), pipeline_mode=pl.Buffered(1))
    return pl.BlockSpec(shape, lambda i: (0, 0))


def _fused_mlp_kernel(*args, num_layers, precision):
    """args = (x_ref, w0, b0, w1, b1, ..., o_ref).

    One batch tile: unrolled layer loop, MXU matmul (f32 accumulation, explicit
    precision), VPU bias add, EUP tanh.  The activation is carried as a value
    (no scratch round trip); single cast at the final store.
    """
    x_ref = args[0]
    wb = args[1:1 + 2 * num_layers]
    o_ref = args[1 + 2 * num_layers]

    h = x_ref[...].astype(jnp.float32)
    for i in range(num_layers):
        w = wb[2 * i][...]
        b = wb[2 * i + 1][...].astype(jnp.float32)
        lhs = h if w.dtype == jnp.float32 else h.astype(w.dtype)
        y = jnp.dot(lhs, w, preferred_element_type=jnp.float32,
                    precision=precision) + b
        if i < num_layers - 1:
            h = jnp.tanh(y)                      # EUP, stays f32
        else:
            o_ref[...] = y.astype(o_ref.dtype)   # single cast at the end


def mlp_forward(params, x, *, tb_max=TB_MAX,
                precision=jax.lax.Precision.HIGHEST, weight_dtype=None):
    """Fused MLP forward.  params: list of (w:(fan_in, fan_out), b:(1, fan_out));
    x: (B, input_size).  Matches MLP.forward: tanh after every layer but the last."""
    num_layers = len(params)
    B, in_dim = x.shape
    out_dim = params[-1][0].shape[1]
    itemsize = x.dtype.itemsize

    # Hidden (VMEM-only) dims are lane-padded; HBM-facing in/out dims stay tiny.
    dims = [in_dim] + [w.shape[1] for w, _ in params]
    dims_p = [dims[0]] + [_round_up(d, LANE) for d in dims[1:-1]] + [dims[-1]]

    # Choose resident-weight dtype (auto bf16 fallback for large models / v7x).
    w_f32_bytes = 4 * sum(dims_p[i] * dims_p[i + 1] + dims_p[i + 1]
                          for i in range(num_layers))
    if weight_dtype is None:
        weight_dtype = (jnp.bfloat16 if w_f32_bytes > _BF16_WEIGHT_THRESHOLD_BYTES
                        else jnp.float32)

    # Zero-pad weights/biases only on hidden dims; padded lanes of hidden
    # activations stay exactly zero (zero cols + zero bias -> tanh(0)=0).
    flat_wb = []
    for (w, b), din_p, dout_p in zip(params, dims_p[:-1], dims_p[1:]):
        wp = jnp.pad(w, ((0, din_p - w.shape[0]), (0, dout_p - w.shape[1])))
        bp = jnp.pad(b.reshape(1, -1), ((0, 0), (0, dout_p - b.shape[-1])))
        flat_wb += [wp.astype(weight_dtype), bp.astype(jnp.float32)]

    # ---- batch tiling: tb multiple of 8; >=2 grid steps when the batch allows
    # (2-TC occupancy on v7x + DMA/compute overlap); minimal wrapper-side pad. ----
    B_sub = _round_up(B, SUBLANE)
    nsteps = pl.cdiv(B_sub, tb_max)
    if B_sub > SUBLANE:
        nsteps = max(nsteps, 2)
    tb = _round_up(pl.cdiv(B_sub, nsteps), SUBLANE)
    B_pad = _round_up(B_sub, tb)
    xp = x if B_pad == B else jnp.pad(x, ((0, B_pad - B), (0, 0)))
    grid = (B_pad // tb,)

    # ---- specs ----
    in_specs = [pl.BlockSpec((tb, in_dim), lambda i: (i, 0))]
    in_specs += [_resident_spec(a.shape) for a in flat_wb]
    out_specs = pl.BlockSpec((tb, out_dim), lambda i: (i, 0))

    # ---- VMEM budget: double-buffered x/out blocks + resident weights ----
    wb_bytes = sum(int(a.size) * a.dtype.itemsize for a in flat_wb)
    wb_bufs = 1 if _HAS_PIPELINE_MODE else 2
    io_bytes = 2 * tb * (in_dim + out_dim) * itemsize
    vmem_need = wb_bufs * wb_bytes + io_bytes
    vmem_limit = int(min(max(int(vmem_need * 1.5) + (2 << 20), 32 << 20), 64 << 20))

    # ---- cost estimate (scheduling hint for XLA around the custom call) ----
    flops = 2 * B_pad * sum(dims_p[i] * dims_p[i + 1] for i in range(num_layers))
    transcendentals = B_pad * sum(dims_p[1:-1])
    bytes_accessed = int(xp.size) * itemsize + wb_bytes + B_pad * out_dim * itemsize
    cost = pl.CostEstimate(flops=int(flops), transcendentals=int(transcendentals),
                           bytes_accessed=int(bytes_accessed))

    kernel = functools.partial(_fused_mlp_kernel, num_layers=num_layers,
                               precision=precision)
    out = pl.pallas_call(
        kernel,
        out_shape=jax.ShapeDtypeStruct((B_pad, out_dim), x.dtype),
        grid=grid,
        in_specs=in_specs,
        out_specs=out_specs,
        compiler_params=pltpu.CompilerParams(
            dimension_semantics=("parallel",),
            vmem_limit_bytes=vmem_limit),
        cost_estimate=cost,
    )(xp, *flat_wb)

    return out if B_pad == B else out[:B]


def init_mlp_params(key, input_size, output_size, hidden_size, num_hidden,
                    dtype=jnp.float32):
    """Matches MLP.init_layers: [in->h] + num_hidden*[h->h] + [h->out],
    xavier_normal_ weights, zero biases.  Weights stored (in, out) so the kernel
    computes y = x @ W + b (== PyTorch x @ W.T + b with W:(out, in))."""
    sizes = [(input_size, hidden_size)]
    sizes += [(hidden_size, hidden_size)] * num_hidden
    sizes += [(hidden_size, output_size)]
    params = []
    for (fan_in, fan_out) in sizes:
        key, sub = jax.random.split(key)
        std = (2.0 / (fan_in + fan_out)) ** 0.5   # xavier normal (gain=1)
        w = std * jax.random.normal(sub, (fan_in, fan_out), dtype=dtype)
        b = jnp.zeros((1, fan_out), dtype=dtype)
        params.append((w, b))
    return params


def mlp_forward_ref(params, x):
    n = len(params)
    for i, (w, b) in enumerate(params):
        x = jnp.dot(x, w, precision=jax.lax.Precision.HIGHEST) + b
        if i < n - 1:
            x = jnp.tanh(x)
    return x


if __name__ == "__main__":
    key = jax.random.PRNGKey(0)
    k_param, k_x = jax.random.split(key)

    input_size, output_size, hidden_size, num_hidden = 4, 2, 32, 2
    batch = 8

    params = init_mlp_params(k_param, input_size, output_size, hidden_size, num_hidden)
    x = jax.random.normal(k_x, (batch, input_size), dtype=jnp.float32)

    out = jax.block_until_ready(mlp_forward(params, x))
    ref = mlp_forward_ref(params, x)

    assert out.shape == (batch, output_size), out.shape
    assert jnp.allclose(out, ref, atol=1e-5, rtol=1e-5), "mismatch vs reference"

    print("KERNEL_OK")
</pallas_src>

<mosaic_0001>
module attributes {stable_mosaic.version = 11 : i64} {
  func.func @_fused_mlp_kernel(%arg0: i32, %arg1: memref<8x4xf32, #tpu.memory_space<vmem>>, %arg2: memref<4x128xf32, #tpu.memory_space<vmem>>, %arg3: memref<1x128xf32, #tpu.memory_space<vmem>>, %arg4: memref<128x128xf32, #tpu.memory_space<vmem>>, %arg5: memref<1x128xf32, #tpu.memory_space<vmem>>, %arg6: memref<128x128xf32, #tpu.memory_space<vmem>>, %arg7: memref<1x128xf32, #tpu.memory_space<vmem>>, %arg8: memref<128x2xf32, #tpu.memory_space<vmem>>, %arg9: memref<1x2xf32, #tpu.memory_space<vmem>>, %arg10: memref<8x2xf32, #tpu.memory_space<vmem>>) attributes {dimension_semantics = [#tpu.dimension_semantics<parallel>], iteration_bounds = array<i64: 1>, scalar_prefetch = 0 : i64, scratch_operands = 0 : i64, tpu.core_type = #tpu.core_type<tc>, window_params = [{transform_indices = @transform_0, window_bounds = array<i64: 8, 4>}, {pipeline_mode = #tpu.pipeline_mode<synchronous>, transform_indices = @transform_1, window_bounds = array<i64: 4, 128>}, {pipeline_mode = #tpu.pipeline_mode<synchronous>, transform_indices = @transform_2, window_bounds = array<i64: 1, 128>}, {pipeline_mode = #tpu.pipeline_mode<synchronous>, transform_indices = @transform_3, window_bounds = array<i64: 128, 128>}, {pipeline_mode = #tpu.pipeline_mode<synchronous>, transform_indices = @transform_4, window_bounds = array<i64: 1, 128>}, {pipeline_mode = #tpu.pipeline_mode<synchronous>, transform_indices = @transform_5, window_bounds = array<i64: 128, 128>}, {pipeline_mode = #tpu.pipeline_mode<synchronous>, transform_indices = @transform_6, window_bounds = array<i64: 1, 128>}, {pipeline_mode = #tpu.pipeline_mode<synchronous>, transform_indices = @transform_7, window_bounds = array<i64: 128, 2>}, {pipeline_mode = #tpu.pipeline_mode<synchronous>, transform_indices = @transform_8, window_bounds = array<i64: 1, 2>}, {transform_indices = @transform_9, window_bounds = array<i64: 8, 2>}]} {
    %c0 = arith.constant 0 : index
    %c0_0 = arith.constant 0 : index
    %0 = vector.load %arg1[%c0, %c0_0] : memref<8x4xf32, #tpu.memory_space<vmem>>, vector<8x4xf32>
    %c0_1 = arith.constant 0 : index
    %c0_2 = arith.constant 0 : index
    %1 = vector.load %arg2[%c0_1, %c0_2] : memref<4x128xf32, #tpu.memory_space<vmem>>, vector<4x128xf32>
    %c0_3 = arith.constant 0 : index
    %c0_4 = arith.constant 0 : index
    %2 = vector.load %arg3[%c0_3, %c0_4] : memref<1x128xf32, #tpu.memory_space<vmem>>, vector<1x128xf32>
    %cst = arith.constant dense<0.000000e+00> : vector<8x128xf32>
    %3 = tpu.matmul %0, %1, %cst {dimension_numbers = #tpu.dot_dimension_numbers<[1], [0], [0], [1], [0, 0, 1, 1], [], []>, precision = #tpu.contract_precision<fp32>} : vector<8x4xf32>, vector<4x128xf32>, vector<8x128xf32> -> vector<8x128xf32>
    %4 = vector.broadcast %2 : vector<1x128xf32> to vector<8x128xf32>
    %5 = arith.addf %3, %4 : vector<8x128xf32>
    %6 = math.tanh %5 : vector<8x128xf32>
    %c0_5 = arith.constant 0 : index
    %c0_6 = arith.constant 0 : index
    %7 = vector.load %arg4[%c0_5, %c0_6] : memref<128x128xf32, #tpu.memory_space<vmem>>, vector<128x128xf32>
    %c0_7 = arith.constant 0 : index
    %c0_8 = arith.constant 0 : index
    %8 = vector.load %arg5[%c0_7, %c0_8] : memref<1x128xf32, #tpu.memory_space<vmem>>, vector<1x128xf32>
    %cst_9 = arith.constant dense<0.000000e+00> : vector<8x128xf32>
    %9 = tpu.matmul %6, %7, %cst_9 {dimension_numbers = #tpu.dot_dimension_numbers<[1], [0], [0], [1], [0, 0, 1, 1], [], []>, precision = #tpu.contract_precision<fp32>} : vector<8x128xf32>, vector<128x128xf32>, vector<8x128xf32> -> vector<8x128xf32>
    %10 = vector.broadcast %8 : vector<1x128xf32> to vector<8x128xf32>
    %11 = arith.addf %9, %10 : vector<8x128xf32>
    %12 = math.tanh %11 : vector<8x128xf32>
    %c0_10 = arith.constant 0 : index
    %c0_11 = arith.constant 0 : index
    %13 = vector.load %arg6[%c0_10, %c0_11] : memref<128x128xf32, #tpu.memory_space<vmem>>, vector<128x128xf32>
    %c0_12 = arith.constant 0 : index
    %c0_13 = arith.constant 0 : index
    %14 = vector.load %arg7[%c0_12, %c0_13] : memref<1x128xf32, #tpu.memory_space<vmem>>, vector<1x128xf32>
    %cst_14 = arith.constant dense<0.000000e+00> : vector<8x128xf32>
    %15 = tpu.matmul %12, %13, %cst_14 {dimension_numbers = #tpu.dot_dimension_numbers<[1], [0], [0], [1], [0, 0, 1, 1], [], []>, precision = #tpu.contract_precision<fp32>} : vector<8x128xf32>, vector<128x128xf32>, vector<8x128xf32> -> vector<8x128xf32>
    %16 = vector.broadcast %14 : vector<1x128xf32> to vector<8x128xf32>
    %17 = arith.addf %15, %16 : vector<8x128xf32>
    %18 = math.tanh %17 : vector<8x128xf32>
    %c0_15 = arith.constant 0 : index
    %c0_16 = arith.constant 0 : index
    %19 = vector.load %arg8[%c0_15, %c0_16] : memref<128x2xf32, #tpu.memory_space<vmem>>, vector<128x2xf32>
    %c0_17 = arith.constant 0 : index
    %c0_18 = arith.constant 0 : index
    %20 = vector.load %arg9[%c0_17, %c0_18] : memref<1x2xf32, #tpu.memory_space<vmem>>, vector<1x2xf32>
    %cst_19 = arith.constant dense<0.000000e+00> : vector<8x2xf32>
    %21 = tpu.matmul %18, %19, %cst_19 {dimension_numbers = #tpu.dot_dimension_numbers<[1], [0], [0], [1], [0, 0, 1, 1], [], []>, precision = #tpu.contract_precision<fp32>} : vector<8x128xf32>, vector<128x2xf32>, vector<8x2xf32> -> vector<8x2xf32>
    %22 = vector.broadcast %20 : vector<1x2xf32> to vector<8x2xf32>
    %23 = arith.addf %21, %22 : vector<8x2xf32>
    %c0_20 = arith.constant 0 : index
    %c0_21 = arith.constant 0 : index
    %24 = vector.load %arg10[%c0_20, %c0_21] : memref<8x2xf32, #tpu.memory_space<vmem>>, vector<8x2xf32>
    tpu.vector_store %arg10[%c0_20, %c0_21], %23 {strides = array<i32>} : memref<8x2xf32, #tpu.memory_space<vmem>>, vector<8x2xf32>,
    return
  }
  func.func @transform_0(%arg0: i32) -> (i32, i32) {
    %c0_i32 = arith.constant 0 : i32
    %c0_i32_0 = arith.constant 0 : i32
    return %arg0, %c0_i32 : i32, i32
  }
  func.func @transform_1(%arg0: i32) -> (i32, i32) {
    %c0_i32 = arith.constant 0 : i32
    %c0_i32_0 = arith.constant 0 : i32
    %c0_i32_1 = arith.constant 0 : i32
    return %c0_i32, %c0_i32_0 : i32, i32
  }
  func.func @transform_2(%arg0: i32) -> (i32, i32) {
    %c0_i32 = arith.constant 0 : i32
    %c0_i32_0 = arith.constant 0 : i32
    %c0_i32_1 = arith.constant 0 : i32
    return %c0_i32, %c0_i32_0 : i32, i32
  }
  func.func @transform_3(%arg0: i32) -> (i32, i32) {
    %c0_i32 = arith.constant 0 : i32
    %c0_i32_0 = arith.constant 0 : i32
    %c0_i32_1 = arith.constant 0 : i32
    return %c0_i32, %c0_i32_0 : i32, i32
  }
  func.func @transform_4(%arg0: i32) -> (i32, i32) {
    %c0_i32 = arith.constant 0 : i32
    %c0_i32_0 = arith.constant 0 : i32
    %c0_i32_1 = arith.constant 0 : i32
    return %c0_i32, %c0_i32_0 : i32, i32
  }
  func.func @transform_5(%arg0: i32) -> (i32, i32) {
    %c0_i32 = arith.constant 0 : i32
    %c0_i32_0 = arith.constant 0 : i32
    %c0_i32_1 = arith.constant 0 : i32
    return %c0_i32, %c0_i32_0 : i32, i32
  }
  func.func @transform_6(%arg0: i32) -> (i32, i32) {
    %c0_i32 = arith.constant 0 : i32
    %c0_i32_0 = arith.constant 0 : i32
    %c0_i32_1 = arith.constant 0 : i32
    return %c0_i32, %c0_i32_0 : i32, i32
  }
  func.func @transform_7(%arg0: i32) -> (i32, i32) {
    %c0_i32 = arith.constant 0 : i32
    %c0_i32_0 = arith.constant 0 : i32
    %c0_i32_1 = arith.constant 0 : i32
    return %c0_i32, %c0_i32_0 : i32, i32
  }
  func.func @transform_8(%arg0: i32) -> (i32, i32) {
    %c0_i32 = arith.constant 0 : i32
    %c0_i32_0 = arith.constant 0 : i32
    %c0_i32_1 = arith.constant 0 : i32
    return %c0_i32, %c0_i32_0 : i32, i32
  }
  func.func @transform_9(%arg0: i32) -> (i32, i32) {
    %c0_i32 = arith.constant 0 : i32
    %c0_i32_0 = arith.constant 0 : i32
    return %arg0, %c0_i32 : i32, i32
  }
}

</mosaic_0001>

<llo_original>
// kernel: tpu_custom_call.1
$region0: #{tpu_custom_call.1}
  #allocation0 [shape = 'u32[]', space=smem, size = 0x4, offset = 0x4, fixed_abs, tag = 'smem constant byte address 0x4 - core index']
  #allocation1 [shape = 'u32[144,128]{1,0:T(1,128)}', space=vmem, size = 0x12000, scoped, tag = 'internal scratch']
  %s0 = inlined_call_operand.vmem [shape: f32[8,4], index: 0, kind: input, shape index: {}]
  %s1 = inlined_call_operand.vmem [shape: f32[4,128], index: 1, kind: input, shape index: {}]
  %s2 = inlined_call_operand.vmem [shape: f32[1,128], index: 2, kind: input, shape index: {}]
  %s3 = inlined_call_operand.vmem [shape: f32[128,128], index: 3, kind: input, shape index: {}]
  %s4 = inlined_call_operand.vmem [shape: f32[1,128], index: 4, kind: input, shape index: {}]
  %s5 = inlined_call_operand.hbm [shape: f32[128,128], index: 5, kind: input, shape index: {}]
  %s6 = inlined_call_operand.vmem [shape: f32[1,128], index: 6, kind: input, shape index: {}]
  %s7 = inlined_call_operand.vmem [shape: f32[128,2], index: 7, kind: input, shape index: {}]
  %s8 = inlined_call_operand.vmem [shape: f32[1,2], index: 8, kind: input, shape index: {}]
  %s9 = inlined_call_operand.vmem [shape: f32[8,2], index: 9, kind: output, shape index: {}]
  %s10 = sld [smem:[#allocation0]]
  $region50: #{tpu_custom_call.1} parent=0
    _
  %s12 = ssub.s32 1, %s10
  %s13 = scalar_select 0, %s12, %s10
  $region1: #{tpu_custom_call.1} parent=0
    #allocation2 [shape = 'u8[65536]{0}', space=vmem, size = 0x10000, scoped, tag = 'input window, operand 5, single buffered']
    #allocation3 [shape = 's32[1]{0}', space=sflag, size = 0x4, scoped, tag = 'scoped memory for tpu_custom_call.1']
    %14 = vsyncpa [#allocation3], 0
    // Predicated region
    $region2: #{tpu_custom_call.1} parent=1 // pred_check
      _
    $region3: #{tpu_custom_call.1} parent=1 // pred_check_branch
      %16 = sbr.rel (0) target = $region5
    $region4: #{tpu_custom_call.1} parent=1 // pred_region
      _
    $region5: #{tpu_custom_call.1} parent=1 // pred_fallthru
      _
    // Predicated region
    $region6: #{tpu_custom_call.1} parent=1 // pred_check
      _
    $region7: #{tpu_custom_call.1} parent=1 // pred_check_branch
      %18 = sbr.rel (0) target = $region9
    $region8: #{tpu_custom_call.1} parent=1 // pred_region
      _
    $region9: #{tpu_custom_call.1} parent=1 // pred_fallthru
      _
    // Predicated region
    $region10: #{tpu_custom_call.1} parent=1 // pred_check
      _
    $region11: #{tpu_custom_call.1} parent=1 // pred_check_branch
      %20 = sbr.rel (0) target = $region13
    $region12: #{tpu_custom_call.1} parent=1 // pred_region
      _
    $region13: #{tpu_custom_call.1} parent=1 // pred_fallthru
      _
    // Predicated region
    $region14: #{tpu_custom_call.1} parent=1 // pred_check
      _
    $region15: #{tpu_custom_call.1} parent=1 // pred_check_branch
      %22 = sbr.rel (0) target = $region17
    $region16: #{tpu_custom_call.1} parent=1 // pred_region
      _
    $region17: #{tpu_custom_call.1} parent=1 // pred_fallthru
      _
    // Predicated region
    $region18: #{tpu_custom_call.1} parent=1 // pred_check
      _
    $region19: #{tpu_custom_call.1} parent=1 // pred_check_branch
      %24 = sbr.rel (0) target = $region21
    $region20: #{tpu_custom_call.1} parent=1 // pred_region
      _
    $region21: #{tpu_custom_call.1} parent=1 // pred_fallthru
      _
    // Predicated region
    $region22: #{tpu_custom_call.1} parent=1 // pred_check
      _
    $region23: #{tpu_custom_call.1} parent=1 // pred_check_branch
      %26 = sbr.rel (0) target = $region25
    $region24: #{tpu_custom_call.1} parent=1 // pred_region
      %s28 = ssub.s32 2048, 2048
      %29 = vsyncadd [#allocation3], %s28
      %s30 = sshll.u32 [#allocation2], 4
      %s31 = int_to_ptr.vmem [resolvable:$true] %s30
      %36 = dma.hbm_to_vmem [thread:$0]  %s5, 2048, %s31, [#allocation3], 128, 128, 8
    $region25: #{tpu_custom_call.1} parent=1 // pred_fallthru
      _
    // Predicated region
    $region26: #{tpu_custom_call.1} parent=1 // pred_check
      _
    $region27: #{tpu_custom_call.1} parent=1 // pred_check_branch
      %38 = sbr.rel (0) target = $region29
    $region28: #{tpu_custom_call.1} parent=1 // pred_region
      _
    $region29: #{tpu_custom_call.1} parent=1 // pred_fallthru
      _
    // Predicated region
    $region30: #{tpu_custom_call.1} parent=1 // pred_check
      _
    $region31: #{tpu_custom_call.1} parent=1 // pred_check_branch
      %40 = sbr.rel (0) target = $region33
    $region32: #{tpu_custom_call.1} parent=1 // pred_region
      _
    $region33: #{tpu_custom_call.1} parent=1 // pred_fallthru
      _
    // Predicated region
    $region34: #{tpu_custom_call.1} parent=1 // pred_check
      _
    $region35: #{tpu_custom_call.1} parent=1 // pred_check_branch
      %42 = sbr.rel (0) target = $region37
    $region36: #{tpu_custom_call.1} parent=1 // pred_region
      _
    $region37: #{tpu_custom_call.1} parent=1 // pred_fallthru
      _
    // Predicated region
    $region38: #{tpu_custom_call.1} parent=1 // pred_check
      _
    $region39: #{tpu_custom_call.1} parent=1 // pred_check_branch
      %44 = sbr.rel (0) target = $region41
    $region40: #{tpu_custom_call.1} parent=1 // pred_region
      %45 = dma.done [#allocation3], 2048
    $region41: #{tpu_custom_call.1} parent=1 // pred_fallthru
      _
    %v46 = vld [vmem:[%s0] sm:$0xff]
    %v47 = vld [vmem:[%s1] sm:$0xf]
    %v48 = vld [vmem:[%s2] sm:$0x1]
    %v50 = vlaneseq
    %v51 = vshrl.u32 %v50, 7
    %v52 = vsub.s32 0, %v51
    %v53 = vrot.slane %v48, %v52
    %vm55 = vcmask 31744
    %v57 = vsel %vm55, %v46, 0
    %vm59 = vcmask 1043456
    %v61 = vsel %vm59, %v47, 0
    %63 = vmatprep.subr.mxu0 0.0
    %64 = vmatpush1.msra.mxu0 0.0
    %65 = vmatprep.subr.mxu0 0.0
    %66 = vmatpush1.msra.mxu0 0.0
    %67 = vmatprep.subr.mxu0 0.0
    %68 = vmatpush1.msra.mxu0 0.0
    %69 = vmatprep.subr.mxu0 0.0
    %70 = vmatpush1.msra.mxu0 0.0
    %71 = vmatprep.subr.mxu0 0.0
    %72 = vmatpush1.msra.mxu0 0.0
    %73 = vmatprep.subr.mxu0 0.0
    %74 = vmatpush1.msra.mxu0 0.0
    %75 = vmatprep.subr.mxu0 0.0
    %76 = vmatpush1.msra.mxu0 0.0
    %77 = vmatprep.subr.mxu0 0.0
    %78 = vmatpush1.msra.mxu0 0.0
    %79 = vmatprep.subr.mxu0 0.0
    %80 = vmatpush1.msra.mxu0 0.0
    %81 = vmatprep.subr.mxu0 0.0
    %82 = vmatpush1.msra.mxu0 0.0
    %83 = vmatprep.subr.mxu0 0.0
    %84 = vmatpush1.msra.mxu0 0.0
    %85 = vmatprep.subr.mxu0 0.0
    %86 = vmatpush1.msra.mxu0 0.0
    %87 = vmatprep.subr.mxu0 0.0
    %88 = vmatpush1.msra.mxu0 0.0
    %89 = vmatprep.subr.mxu0 0.0
    %90 = vmatpush1.msra.mxu0 0.0
    %91 = vmatprep.subr.mxu0 0.0
    %92 = vmatpush1.msra.mxu0 0.0
    %93 = vmatprep.subr.mxu0 0.0
    %v94 = vand.u32 %v61, 4294901760
    %95 = vmatpush1.msra.mxu0 %v94
    %96 = vmatprep.subr.mxu0 0.0
    %97 = vmatpush2.msra.mxu0 0.0
    %98 = vmatprep.subr.mxu0 0.0
    %99 = vmatpush2.msra.mxu0 0.0
    %100 = vmatprep.subr.mxu0 0.0
    %101 = vmatpush2.msra.mxu0 0.0
    %102 = vmatprep.subr.mxu0 0.0
    %103 = vmatpush2.msra.mxu0 0.0
    %104 = vmatprep.subr.mxu0 0.0
    %105 = vmatpush2.msra.mxu0 0.0
    %106 = vmatprep.subr.mxu0 0.0
    %107 = vmatpush2.msra.mxu0 0.0
    %108 = vmatprep.subr.mxu0 0.0
    %109 = vmatpush2.msra.mxu0 0.0
    %110 = vmatprep.subr.mxu0 0.0
    %111 = vmatpush2.msra.mxu0 0.0
    %112 = vmatprep.subr.mxu0 0.0
    %113 = vmatpush2.msra.mxu0 0.0
    %114 = vmatprep.subr.mxu0 0.0
    %115 = vmatpush2.msra.mxu0 0.0
    %116 = vmatprep.subr.mxu0 0.0
    %117 = vmatpush2.msra.mxu0 0.0
    %118 = vmatprep.subr.mxu0 0.0
    %119 = vmatpush2.msra.mxu0 0.0
    %120 = vmatprep.subr.mxu0 0.0
    %121 = vmatpush2.msra.mxu0 0.0
    %122 = vmatprep.subr.mxu0 0.0
    %123 = vmatpush2.msra.mxu0 0.0
    %124 = vmatprep.subr.mxu0 0.0
    %125 = vmatpush2.msra.mxu0 0.0
    %126 = vmatprep.subr.mxu0 0.0
    %127 = vmatpush2.msra.mxu0 0.0
    %128 = vmatprep.mubr.f32.mxu0 0.0
    %v129 = vand.u32 %v57, 4294901760
    %v130 = vsub.f32 %v57, %v129
    %v131 = vand.u32 %v130, 4294901760
    %v132 = vsub.f32 %v130, %v131
    %v133 = vand.u32 %v132, 4294901760
    %134 = vmatmul.mubr.f32.gmra.mxu0 %v133
    %v135 = vpop.f32.mrf.mxu0
    %v136 = vadd.f32 %v53, %v135
    %v137 = vpop.f32.mrf.mxu0
    %138 = vdwg.mxu0
    %139 = vmatprep.subr.mxu0 0.0
    %140 = vmatpush1.msra.mxu0 0.0
    %141 = vmatprep.subr.mxu0 0.0
    %142 = vmatpush1.msra.mxu0 0.0
    %143 = vmatprep.subr.mxu0 0.0
    %144 = vmatpush1.msra.mxu0 0.0
    %145 = vmatprep.subr.mxu0 0.0
    %146 = vmatpush1.msra.mxu0 0.0
    %147 = vmatprep.subr.mxu0 0.0
    %148 = vmatpush1.msra.mxu0 0.0
    %149 = vmatprep.subr.mxu0 0.0
    %150 = vmatpush1.msra.mxu0 0.0
    %151 = vmatprep.subr.mxu0 0.0
    %152 = vmatpush1.msra.mxu0 0.0
    %153 = vmatprep.subr.mxu0 0.0
    %154 = vmatpush1.msra.mxu0 0.0
    %155 = vmatprep.subr.mxu0 0.0
    %156 = vmatpush1.msra.mxu0 0.0
    %157 = vmatprep.subr.mxu0 0.0
    %158 = vmatpush1.msra.mxu0 0.0
    %159 = vmatprep.subr.mxu0 0.0
    %160 = vmatpush1.msra.mxu0 0.0
    %161 = vmatprep.subr.mxu0 0.0
    %162 = vmatpush1.msra.mxu0 0.0
    %163 = vmatprep.subr.mxu0 0.0
    %164 = vmatpush1.msra.mxu0 0.0
    %165 = vmatprep.subr.mxu0 0.0
    %166 = vmatpush1.msra.mxu0 0.0
    %167 = vmatprep.subr.mxu0 0.0
    %168 = vmatpush1.msra.mxu0 0.0
    %169 = vmatprep.subr.mxu0 0.0
    %v170 = vand.u32 %v61, 4294901760
    %v171 = vsub.f32 %v61, %v170
    %v172 = vand.u32 %v171, 4294901760
    %v173 = vsub.f32 %v171, %v172
    %v174 = vand.u32 %v173, 4294901760
    %175 = vmatpush1.msra.mxu0 %v174
    %176 = vmatprep.subr.mxu0 0.0
    %177 = vmatpush2.msra.mxu0 0.0
    %178 = vmatprep.subr.mxu0 0.0
    %179 = vmatpush2.msra.mxu0 0.0
    %180 = vmatprep.subr.mxu0 0.0
    %181 = vmatpush2.msra.mxu0 0.0
    %182 = vmatprep.subr.mxu0 0.0
    %183 = vmatpush2.msra.mxu0 0.0
    %184 = vmatprep.subr.mxu0 0.0
    %185 = vmatpush2.msra.mxu0 0.0
    %186 = vmatprep.subr.mxu0 0.0
    %187 = vmatpush2.msra.mxu0 0.0
    %188 = vmatprep.subr.mxu0 0.0
    %189 = vmatpush2.msra.mxu0 0.0
    %190 = vmatprep.subr.mxu0 0.0
    %191 = vmatpush2.msra.mxu0 0.0
    %192 = vmatprep.subr.mxu0 0.0
    %193 = vmatpush2.msra.mxu0 0.0
    %194 = vmatprep.subr.mxu0 0.0
    %195 = vmatpush2.msra.mxu0 0.0
    %196 = vmatprep.subr.mxu0 0.0
    %197 = vmatpush2.msra.mxu0 0.0
    %198 = vmatprep.subr.mxu0 0.0
    %199 = vmatpush2.msra.mxu0 0.0
    %200 = vmatprep.subr.mxu0 0.0
    %201 = vmatpush2.msra.mxu0 0.0
    %202 = vmatprep.subr.mxu0 0.0
    %203 = vmatpush2.msra.mxu0 0.0
    %204 = vmatprep.subr.mxu0 0.0
    %205 = vmatpush2.msra.mxu0 0.0
    %206 = vmatprep.subr.mxu0 0.0
    %207 = vmatpush2.msra.mxu0 0.0
    %208 = vmatprep.mubr.f32.mxu0 0.0
    %v209 = vand.u32 %v57, 4294901760
    %210 = vmatmul.mubr.f32.gmra.mxu0 %v209
    %v211 = vpop.f32.mrf.mxu0
    %v212 = vadd.f32 %v136, %v211
    %v213 = vpop.f32.mrf.mxu0
    %214 = vdwg.mxu0
    %215 = vmatprep.subr.mxu0 0.0
    %216 = vmatpush1.msra.mxu0 0.0
    %217 = vmatprep.subr.mxu0 0.0
    %218 = vmatpush1.msra.mxu0 0.0
    %219 = vmatprep.subr.mxu0 0.0
    %220 = vmatpush1.msra.mxu0 0.0
    %221 = vmatprep.subr.mxu0 0.0
    %222 = vmatpush1.msra.mxu0 0.0
    %223 = vmatprep.subr.mxu0 0.0
    %224 = vmatpush1.msra.mxu0 0.0
    %225 = vmatprep.subr.mxu0 0.0
    %226 = vmatpush1.msra.mxu0 0.0
    %227 = vmatprep.subr.mxu0 0.0
    %228 = vmatpush1.msra.mxu0 0.0
    %229 = vmatprep.subr.mxu0 0.0
    %230 = vmatpush1.msra.mxu0 0.0
    %231 = vmatprep.subr.mxu0 0.0
    %232 = vmatpush1.msra.mxu0 0.0
    %233 = vmatprep.subr.mxu0 0.0
    %234 = vmatpush1.msra.mxu0 0.0
    %235 = vmatprep.subr.mxu0 0.0
    %236 = vmatpush1.msra.mxu0 0.0
    %237 = vmatprep.subr.mxu0 0.0
    %238 = vmatpush1.msra.mxu0 0.0
    %239 = vmatprep.subr.mxu0 0.0
    %240 = vmatpush1.msra.mxu0 0.0
    %241 = vmatprep.subr.mxu0 0.0
    %242 = vmatpush1.msra.mxu0 0.0
    %243 = vmatprep.subr.mxu0 0.0
    %244 = vmatpush1.msra.mxu0 0.0
    %245 = vmatprep.subr.mxu0 0.0
    %v246 = vand.u32 %v61, 4294901760
    %v247 = vsub.f32 %v61, %v246
    %248 = vmatpush1.msra.mxu0 %v247
    %249 = vmatprep.subr.mxu0 0.0
    %250 = vmatpush2.msra.mxu0 0.0
    %251 = vmatprep.subr.mxu0 0.0
    %252 = vmatpush2.msra.mxu0 0.0
    %253 = vmatprep.subr.mxu0 0.0
    %254 = vmatpush2.msra.mxu0 0.0
    %255 = vmatprep.subr.mxu0 0.0
    %256 = vmatpush2.msra.mxu0 0.0
    %257 = vmatprep.subr.mxu0 0.0
    %258 = vmatpush2.msra.mxu0 0.0
    %259 = vmatprep.subr.mxu0 0.0
    %260 = vmatpush2.msra.mxu0 0.0
    %261 = vmatprep.subr.mxu0 0.0
    %262 = vmatpush2.msra.mxu0 0.0
    %263 = vmatprep.subr.mxu0 0.0
    %264 = vmatpush2.msra.mxu0 0.0
    %265 = vmatprep.subr.mxu0 0.0
    %266 = vmatpush2.msra.mxu0 0.0
    %267 = vmatprep.subr.mxu0 0.0
    %268 = vmatpush2.msra.mxu0 0.0
    %269 = vmatprep.subr.mxu0 0.0
    %270 = vmatpush2.msra.mxu0 0.0
    %271 = vmatprep.subr.mxu0 0.0
    %272 = vmatpush2.msra.mxu0 0.0
    %273 = vmatprep.subr.mxu0 0.0
    %274 = vmatpush2.msra.mxu0 0.0
    %275 = vmatprep.subr.mxu0 0.0
    %276 = vmatpush2.msra.mxu0 0.0
    %277 = vmatprep.subr.mxu0 0.0
    %278 = vmatpush2.msra.mxu0 0.0
    %279 = vmatprep.subr.mxu0 0.0
    %280 = vmatpush2.msra.mxu0 0.0
    %281 = vmatprep.mubr.f32.mxu0 0.0
    %v282 = vand.u32 %v57, 4294901760
    %v283 = vsub.f32 %v57, %v282
    %284 = vmatmul.mubr.f32.gmra.mxu0 %v283
    %v285 = vpop.f32.mrf.mxu0
    %v286 = vadd.f32 %v212, %v285
    %v287 = vpop.f32.mrf.mxu0
    %288 = vdwg.mxu0
    %289 = vmatprep.subr.mxu0 0.0
    %290 = vmatpush1.msra.mxu0 0.0
    %291 = vmatprep.subr.mxu0 0.0
    %292 = vmatpush1.msra.mxu0 0.0
    %293 = vmatprep.subr.mxu0 0.0
    %294 = vmatpush1.msra.mxu0 0.0
    %295 = vmatprep.subr.mxu0 0.0
    %296 = vmatpush1.msra.mxu0 0.0
    %297 = vmatprep.subr.mxu0 0.0
    %298 = vmatpush1.msra.mxu0 0.0
    %299 = vmatprep.subr.mxu0 0.0
    %300 = vmatpush1.msra.mxu0 0.0
    %301 = vmatprep.subr.mxu0 0.0
    %302 = vmatpush1.msra.mxu0 0.0
    %303 = vmatprep.subr.mxu0 0.0
    %304 = vmatpush1.msra.mxu0 0.0
    %305 = vmatprep.subr.mxu0 0.0
    %306 = vmatpush1.msra.mxu0 0.0
    %307 = vmatprep.subr.mxu0 0.0
    %308 = vmatpush1.msra.mxu0 0.0
    %309 = vmatprep.subr.mxu0 0.0
    %310 = vmatpush1.msra.mxu0 0.0
    %311 = vmatprep.subr.mxu0 0.0
    %312 = vmatpush1.msra.mxu0 0.0
    %313 = vmatprep.subr.mxu0 0.0
    %314 = vmatpush1.msra.mxu0 0.0
    %315 = vmatprep.subr.mxu0 0.0
    %316 = vmatpush1.msra.mxu0 0.0
    %317 = vmatprep.subr.mxu0 0.0
    %318 = vmatpush1.msra.mxu0 0.0
    %319 = vmatprep.subr.mxu0 0.0
    %v320 = vand.u32 %v61, 4294901760
    %321 = vmatpush1.msra.mxu0 %v320
    %322 = vmatprep.subr.mxu0 0.0
    %323 = vmatpush2.msra.mxu0 0.0
    %324 = vmatprep.subr.mxu0 0.0
    %325 = vmatpush2.msra.mxu0 0.0
    %326 = vmatprep.subr.mxu0 0.0
    %327 = vmatpush2.msra.mxu0 0.0
    %328 = vmatprep.subr.mxu0 0.0
    %329 = vmatpush2.msra.mxu0 0.0
    %330 = vmatprep.subr.mxu0 0.0
    %331 = vmatpush2.msra.mxu0 0.0
    %332 = vmatprep.subr.mxu0 0.0
    %333 = vmatpush2.msra.mxu0 0.0
    %334 = vmatprep.subr.mxu0 0.0
    %335 = vmatpush2.msra.mxu0 0.0
    %336 = vmatprep.subr.mxu0 0.0
    %337 = vmatpush2.msra.mxu0 0.0
    %338 = vmatprep.subr.mxu0 0.0
    %339 = vmatpush2.msra.mxu0 0.0
    %340 = vmatprep.subr.mxu0 0.0
    %341 = vmatpush2.msra.mxu0 0.0
    %342 = vmatprep.subr.mxu0 0.0
    %343 = vmatpush2.msra.mxu0 0.0
    %344 = vmatprep.subr.mxu0 0.0
    %345 = vmatpush2.msra.mxu0 0.0
    %346 = vmatprep.subr.mxu0 0.0
    %347 = vmatpush2.msra.mxu0 0.0
    %348 = vmatprep.subr.mxu0 0.0
    %349 = vmatpush2.msra.mxu0 0.0
    %350 = vmatprep.subr.mxu0 0.0
    %351 = vmatpush2.msra.mxu0 0.0
    %352 = vmatprep.subr.mxu0 0.0
    %353 = vmatpush2.msra.mxu0 0.0
    %354 = vmatprep.mubr.f32.mxu0 0.0
    %v355 = vand.u32 %v57, 4294901760
    %v356 = vsub.f32 %v57, %v355
    %v357 = vand.u32 %v356, 4294901760
    %358 = vmatmul.mubr.f32.gmra.mxu0 %v357
    %v359 = vpop.f32.mrf.mxu0
    %v360 = vadd.f32 %v286, %v359
    %v361 = vpop.f32.mrf.mxu0
    %362 = vdwg.mxu0
    %363 = vmatprep.subr.mxu0 0.0
    %364 = vmatpush1.msra.mxu0 0.0
    %365 = vmatprep.subr.mxu0 0.0
    %366 = vmatpush1.msra.mxu0 0.0
    %367 = vmatprep.subr.mxu0 0.0
    %368 = vmatpush1.msra.mxu0 0.0
    %369 = vmatprep.subr.mxu0 0.0
    %370 = vmatpush1.msra.mxu0 0.0
    %371 = vmatprep.subr.mxu0 0.0
    %372 = vmatpush1.msra.mxu0 0.0
    %373 = vmatprep.subr.mxu0 0.0
    %374 = vmatpush1.msra.mxu0 0.0
    %375 = vmatprep.subr.mxu0 0.0
    %376 = vmatpush1.msra.mxu0 0.0
    %377 = vmatprep.subr.mxu0 0.0
    %378 = vmatpush1.msra.mxu0 0.0
    %379 = vmatprep.subr.mxu0 0.0
    %380 = vmatpush1.msra.mxu0 0.0
    %381 = vmatprep.subr.mxu0 0.0
    %382 = vmatpush1.msra.mxu0 0.0
    %383 = vmatprep.subr.mxu0 0.0
    %384 = vmatpush1.msra.mxu0 0.0
    %385 = vmatprep.subr.mxu0 0.0
    %386 = vmatpush1.msra.mxu0 0.0
    %387 = vmatprep.subr.mxu0 0.0
    %388 = vmatpush1.msra.mxu0 0.0
    %389 = vmatprep.subr.mxu0 0.0
    %390 = vmatpush1.msra.mxu0 0.0
    %391 = vmatprep.subr.mxu0 0.0
    %392 = vmatpush1.msra.mxu0 0.0
    %393 = vmatprep.subr.mxu0 0.0
    %v394 = vand.u32 %v61, 4294901760
    %v395 = vsub.f32 %v61, %v394
    %v396 = vand.u32 %v395, 4294901760
    %397 = vmatpush1.msra.mxu0 %v396
    %398 = vmatprep.subr.mxu0 0.0
    %399 = vmatpush2.msra.mxu0 0.0
    %400 = vmatprep.subr.mxu0 0.0
    %401 = vmatpush2.msra.mxu0 0.0
    %402 = vmatprep.subr.mxu0 0.0
    %403 = vmatpush2.msra.mxu0 0.0
    %404 = vmatprep.subr.mxu0 0.0
    %405 = vmatpush2.msra.mxu0 0.0
    %406 = vmatprep.subr.mxu0 0.0
    %407 = vmatpush2.msra.mxu0 0.0
    %408 = vmatprep.subr.mxu0 0.0
    %409 = vmatpush2.msra.mxu0 0.0
    %410 = vmatprep.subr.mxu0 0.0
    %411 = vmatpush2.msra.mxu0 0.0
    %412 = vmatprep.subr.mxu0 0.0
    %413 = vmatpush2.msra.mxu0 0.0
    %414 = vmatprep.subr.mxu0 0.0
    %415 = vmatpush2.msra.mxu0 0.0
    %416 = vmatprep.subr.mxu0 0.0
    %417 = vmatpush2.msra.mxu0 0.0
    %418 = vmatprep.subr.mxu0 0.0
    %419 = vmatpush2.msra.mxu0 0.0
    %420 = vmatprep.subr.mxu0 0.0
    %421 = vmatpush2.msra.mxu0 0.0
    %422 = vmatprep.subr.mxu0 0.0
    %423 = vmatpush2.msra.mxu0 0.0
    %424 = vmatprep.subr.mxu0 0.0
    %425 = vmatpush2.msra.mxu0 0.0
    %426 = vmatprep.subr.mxu0 0.0
    %427 = vmatpush2.msra.mxu0 0.0
    %428 = vmatprep.subr.mxu0 0.0
    %429 = vmatpush2.msra.mxu0 0.0
    %430 = vmatprep.mubr.f32.mxu0 0.0
    %v431 = vand.u32 %v57, 4294901760
    %432 = vmatmul.mubr.f32.gmra.mxu0 %v431
    %v433 = vpop.f32.mrf.mxu0
    %v434 = vadd.f32 %v360, %v433
    %v435 = vpop.f32.mrf.mxu0
    %436 = vdwg.mxu0
    %437 = vmatprep.subr.mxu0 0.0
    %438 = vmatpush1.msra.mxu0 0.0
    %439 = vmatprep.subr.mxu0 0.0
    %440 = vmatpush1.msra.mxu0 0.0
    %441 = vmatprep.subr.mxu0 0.0
    %442 = vmatpush1.msra.mxu0 0.0
    %443 = vmatprep.subr.mxu0 0.0
    %444 = vmatpush1.msra.mxu0 0.0
    %445 = vmatprep.subr.mxu0 0.0
    %446 = vmatpush1.msra.mxu0 0.0
    %447 = vmatprep.subr.mxu0 0.0
    %448 = vmatpush1.msra.mxu0 0.0
    %449 = vmatprep.subr.mxu0 0.0
    %450 = vmatpush1.msra.mxu0 0.0
    %451 = vmatprep.subr.mxu0 0.0
    %452 = vmatpush1.msra.mxu0 0.0
    %453 = vmatprep.subr.mxu0 0.0
    %454 = vmatpush1.msra.mxu0 0.0
    %455 = vmatprep.subr.mxu0 0.0
    %456 = vmatpush1.msra.mxu0 0.0
    %457 = vmatprep.subr.mxu0 0.0
    %458 = vmatpush1.msra.mxu0 0.0
    %459 = vmatprep.subr.mxu0 0.0
    %460 = vmatpush1.msra.mxu0 0.0
    %461 = vmatprep.subr.mxu0 0.0
    %462 = vmatpush1.msra.mxu0 0.0
    %463 = vmatprep.subr.mxu0 0.0
    %464 = vmatpush1.msra.mxu0 0.0
    %465 = vmatprep.subr.mxu0 0.0
    %466 = vmatpush1.msra.mxu0 0.0
    %467 = vmatprep.subr.mxu0 0.0
    %v468 = vand.u32 %v61, 4294901760
    %469 = vmatpush1.msra.mxu0 %v468
    %470 = vmatprep.subr.mxu0 0.0
    %471 = vmatpush2.msra.mxu0 0.0
    %472 = vmatprep.subr.mxu0 0.0
    %473 = vmatpush2.msra.mxu0 0.0
    %474 = vmatprep.subr.mxu0 0.0
    %475 = vmatpush2.msra.mxu0 0.0
    %476 = vmatprep.subr.mxu0 0.0
    %477 = vmatpush2.msra.mxu0 0.0
    %478 = vmatprep.subr.mxu0 0.0
    %479 = vmatpush2.msra.mxu0 0.0
    %480 = vmatprep.subr.mxu0 0.0
    %481 = vmatpush2.msra.mxu0 0.0
    %482 = vmatprep.subr.mxu0 0.0
    %483 = vmatpush2.msra.mxu0 0.0
    %484 = vmatprep.subr.mxu0 0.0
    %485 = vmatpush2.msra.mxu0 0.0
    %486 = vmatprep.subr.mxu0 0.0
    %487 = vmatpush2.msra.mxu0 0.0
    %488 = vmatprep.subr.mxu0 0.0
    %489 = vmatpush2.msra.mxu0 0.0
    %490 = vmatprep.subr.mxu0 0.0
    %491 = vmatpush2.msra.mxu0 0.0
    %492 = vmatprep.subr.mxu0 0.0
    %493 = vmatpush2.msra.mxu0 0.0
    %494 = vmatprep.subr.mxu0 0.0
    %495 = vmatpush2.msra.mxu0 0.0
    %496 = vmatprep.subr.mxu0 0.0
    %497 = vmatpush2.msra.mxu0 0.0
    %498 = vmatprep.subr.mxu0 0.0
    %499 = vmatpush2.msra.mxu0 0.0
    %500 = vmatprep.subr.mxu0 0.0
    %501 = vmatpush2.msra.mxu0 0.0
    %502 = vmatprep.mubr.f32.mxu0 0.0
    %v503 = vand.u32 %v57, 4294901760
    %504 = vmatmul.mubr.f32.gmra.mxu0 %v503
    %v505 = vpop.f32.mrf.mxu0
    %v506 = vadd.f32 %v434, %v505
    %v507 = vpop.f32.mrf.mxu0
    %508 = vdwg.mxu0
    %v509 = vtanh.pop %v506
    %v510 = vld [vmem:[%s3] sm:$0xff]
    %v511 = vld [vmem:[%s3 + $0x8] sm:$0xff]
    %v512 = vld [vmem:[%s3 + $0x10] sm:$0xff]
    %v513 = vld [vmem:[%s3 + $0x18] sm:$0xff]
    %v514 = vld [vmem:[%s3 + $0x20] sm:$0xff]
    %v515 = vld [vmem:[%s3 + $0x28] sm:$0xff]
    %v516 = vld [vmem:[%s3 + $0x30] sm:$0xff]
    %v517 = vld [vmem:[%s3 + $0x38] sm:$0xff]
    %v518 = vld [vmem:[%s3 + $0x40] sm:$0xff]
    %v519 = vld [vmem:[%s3 + $0x48] sm:$0xff]
    %v520 = vld [vmem:[%s3 + $0x50] sm:$0xff]
    %v521 = vld [vmem:[%s3 + $0x58] sm:$0xff]
    %v522 = vld [vmem:[%s3 + $0x60] sm:$0xff]
    %v523 = vld [vmem:[%s3 + $0x68] sm:$0xff]
    %v524 = vld [vmem:[%s3 + $0x70] sm:$0xff]
    %v525 = vld [vmem:[%s3 + $0x78] sm:$0xff]
    %v526 = vld [vmem:[%s4] sm:$0x1]
    %v528 = vlaneseq
    %v529 = vshrl.u32 %v528, 7
    %v530 = vsub.s32 0, %v529
    %v531 = vrot.slane %v526, %v530
    %533 = vmatprep.subr.mxu0 0.0
    %v534 = vand.u32 %v525, 4294901760
    %535 = vmatpush1.msra.mxu0 %v534
    %536 = vmatprep.subr.mxu0 0.0
    %v537 = vand.u32 %v524, 4294901760
    %538 = vmatpush1.msra.mxu0 %v537
    %539 = vmatprep.subr.mxu0 0.0
    %v540 = vand.u32 %v523, 4294901760
    %541 = vmatpush1.msra.mxu0 %v540
    %542 = vmatprep.subr.mxu0 0.0
    %v543 = vand.u32 %v522, 4294901760
    %544 = vmatpush1.msra.mxu0 %v543
    %545 = vmatprep.subr.mxu0 0.0
    %v546 = vand.u32 %v521, 4294901760
    %547 = vmatpush1.msra.mxu0 %v546
    %548 = vmatprep.subr.mxu0 0.0
    %v549 = vand.u32 %v520, 4294901760
    %550 = vmatpush1.msra.mxu0 %v549
    %551 = vmatprep.subr.mxu0 0.0
    %v552 = vand.u32 %v519, 4294901760
    %553 = vmatpush1.msra.mxu0 %v552
    %554 = vmatprep.subr.mxu0 0.0
    %v555 = vand.u32 %v518, 4294901760
    %556 = vmatpush1.msra.mxu0 %v555
    %557 = vmatprep.subr.mxu0 0.0
    %v558 = vand.u32 %v517, 4294901760
    %559 = vmatpush1.msra.mxu0 %v558
    %560 = vmatprep.subr.mxu0 0.0
    %v561 = vand.u32 %v516, 4294901760
    %562 = vmatpush1.msra.mxu0 %v561
    %563 = vmatprep.subr.mxu0 0.0
    %v564 = vand.u32 %v515, 4294901760
    %565 = vmatpush1.msra.mxu0 %v564
    %566 = vmatprep.subr.mxu0 0.0
    %v567 = vand.u32 %v514, 4294901760
    %568 = vmatpush1.msra.mxu0 %v567
    %569 = vmatprep.subr.mxu0 0.0
    %v570 = vand.u32 %v513, 4294901760
    %571 = vmatpush1.msra.mxu0 %v570
    %572 = vmatprep.subr.mxu0 0.0
    %v573 = vand.u32 %v512, 4294901760
    %574 = vmatpush1.msra.mxu0 %v573
    %575 = vmatprep.subr.mxu0 0.0
    %v576 = vand.u32 %v511, 4294901760
    %577 = vmatpush1.msra.mxu0 %v576
    %578 = vmatprep.subr.mxu0 0.0
    %v579 = vand.u32 %v510, 4294901760
    %580 = vmatpush1.msra.mxu0 %v579
    %581 = vmatprep.subr.mxu0 0.0
    %582 = vmatpush2.msra.mxu0 0.0
    %583 = vmatprep.subr.mxu0 0.0
    %584 = vmatpush2.msra.mxu0 0.0
    %585 = vmatprep.subr.mxu0 0.0
    %586 = vmatpush2.msra.mxu0 0.0
    %587 = vmatprep.subr.mxu0 0.0
    %588 = vmatpush2.msra.mxu0 0.0
    %589 = vmatprep.subr.mxu0 0.0
    %590 = vmatpush2.msra.mxu0 0.0
    %591 = vmatprep.subr.mxu0 0.0
    %592 = vmatpush2.msra.mxu0 0.0
    %593 = vmatprep.subr.mxu0 0.0
    %594 = vmatpush2.msra.mxu0 0.0
    %595 = vmatprep.subr.mxu0 0.0
    %596 = vmatpush2.msra.mxu0 0.0
    %597 = vmatprep.subr.mxu0 0.0
    %598 = vmatpush2.msra.mxu0 0.0
    %599 = vmatprep.subr.mxu0 0.0
    %600 = vmatpush2.msra.mxu0 0.0
    %601 = vmatprep.subr.mxu0 0.0
    %602 = vmatpush2.msra.mxu0 0.0
    %603 = vmatprep.subr.mxu0 0.0
    %604 = vmatpush2.msra.mxu0 0.0
    %605 = vmatprep.subr.mxu0 0.0
    %606 = vmatpush2.msra.mxu0 0.0
    %607 = vmatprep.subr.mxu0 0.0
    %608 = vmatpush2.msra.mxu0 0.0
    %609 = vmatprep.subr.mxu0 0.0
    %610 = vmatpush2.msra.mxu0 0.0
    %611 = vmatprep.subr.mxu0 0.0
    %612 = vmatpush2.msra.mxu0 0.0
    %613 = vmatprep.mubr.f32.mxu0 0.0
    %v614 = vand.u32 %v509, 4294901760
    %v615 = vsub.f32 %v509, %v614
    %v616 = vand.u32 %v615, 4294901760
    %v617 = vsub.f32 %v615, %v616
    %v618 = vand.u32 %v617, 4294901760
    %619 = vmatmul.mubr.f32.gmra.mxu0 %v618
    %v620 = vpop.f32.mrf.mxu0
    %v621 = vadd.f32 %v531, %v620
    %v622 = vpop.f32.mrf.mxu0
    %623 = vdwg.mxu0
    %624 = vmatprep.subr.mxu0 0.0
    %v625 = vand.u32 %v525, 4294901760
    %v626 = vsub.f32 %v525, %v625
    %v627 = vand.u32 %v626, 4294901760
    %v628 = vsub.f32 %v626, %v627
    %v629 = vand.u32 %v628, 4294901760
    %630 = vmatpush1.msra.mxu0 %v629
    %631 = vmatprep.subr.mxu0 0.0
    %v632 = vand.u32 %v524, 4294901760
    %v633 = vsub.f32 %v524, %v632
    %v634 = vand.u32 %v633, 4294901760
    %v635 = vsub.f32 %v633, %v634
    %v636 = vand.u32 %v635, 4294901760
    %637 = vmatpush1.msra.mxu0 %v636
    %638 = vmatprep.subr.mxu0 0.0
    %v639 = vand.u32 %v523, 4294901760
    %v640 = vsub.f32 %v523, %v639
    %v641 = vand.u32 %v640, 4294901760
    %v642 = vsub.f32 %v640, %v641
    %v643 = vand.u32 %v642, 4294901760
    %644 = vmatpush1.msra.mxu0 %v643
    %645 = vmatprep.subr.mxu0 0.0
    %v646 = vand.u32 %v522, 4294901760
    %v647 = vsub.f32 %v522, %v646
    %v648 = vand.u32 %v647, 4294901760
    %v649 = vsub.f32 %v647, %v648
    %v650 = vand.u32 %v649, 4294901760
    %651 = vmatpush1.msra.mxu0 %v650
    %652 = vmatprep.subr.mxu0 0.0
    %v653 = vand.u32 %v521, 4294901760
    %v654 = vsub.f32 %v521, %v653
    %v655 = vand.u32 %v654, 4294901760
    %v656 = vsub.f32 %v654, %v655
    %v657 = vand.u32 %v656, 4294901760
    %658 = vmatpush1.msra.mxu0 %v657
    %659 = vmatprep.subr.mxu0 0.0
    %v660 = vand.u32 %v520, 4294901760
    %v661 = vsub.f32 %v520, %v660
    %v662 = vand.u32 %v661, 4294901760
    %v663 = vsub.f32 %v661, %v662
    %v664 = vand.u32 %v663, 4294901760
    %665 = vmatpush1.msra.mxu0 %v664
    %666 = vmatprep.subr.mxu0 0.0
    %v667 = vand.u32 %v519, 4294901760
    %v668 = vsub.f32 %v519, %v667
    %v669 = vand.u32 %v668, 4294901760
    %v670 = vsub.f32 %v668, %v669
    %v671 = vand.u32 %v670, 4294901760
    %672 = vmatpush1.msra.mxu0 %v671
    %673 = vmatprep.subr.mxu0 0.0
    %v674 = vand.u32 %v518, 4294901760
    %v675 = vsub.f32 %v518, %v674
    %v676 = vand.u32 %v675, 4294901760
    %v677 = vsub.f32 %v675, %v676
    %v678 = vand.u32 %v677, 4294901760
    %679 = vmatpush1.msra.mxu0 %v678
    %680 = vmatprep.subr.mxu0 0.0
    %v681 = vand.u32 %v517, 4294901760
    %v682 = vsub.f32 %v517, %v681
    %v683 = vand.u32 %v682, 4294901760
    %v684 = vsub.f32 %v682, %v683
    %v685 = vand.u32 %v684, 4294901760
    %686 = vmatpush1.msra.mxu0 %v685
    %687 = vmatprep.subr.mxu0 0.0
    %v688 = vand.u32 %v516, 4294901760
    %v689 = vsub.f32 %v516, %v688
    %v690 = vand.u32 %v689, 4294901760
    %v691 = vsub.f32 %v689, %v690
    %v692 = vand.u32 %v691, 4294901760
    %693 = vmatpush1.msra.mxu0 %v692
    %694 = vmatprep.subr.mxu0 0.0
    %v695 = vand.u32 %v515, 4294901760
    %v696 = vsub.f32 %v515, %v695
    %v697 = vand.u32 %v696, 4294901760
    %v698 = vsub.f32 %v696, %v697
    %v699 = vand.u32 %v698, 4294901760
    %700 = vmatpush1.msra.mxu0 %v699
    %701 = vmatprep.subr.mxu0 0.0
    %v702 = vand.u32 %v514, 4294901760
    %v703 = vsub.f32 %v514, %v702
    %v704 = vand.u32 %v703, 4294901760
    %v705 = vsub.f32 %v703, %v704
    %v706 = vand.u32 %v705, 4294901760
    %707 = vmatpush1.msra.mxu0 %v706
    %708 = vmatprep.subr.mxu0 0.0
    %v709 = vand.u32 %v513, 4294901760
    %v710 = vsub.f32 %v513, %v709
    %v711 = vand.u32 %v710, 4294901760
    %v712 = vsub.f32 %v710, %v711
    %v713 = vand.u32 %v712, 4294901760
    %714 = vmatpush1.msra.mxu0 %v713
    %715 = vmatprep.subr.mxu0 0.0
    %v716 = vand.u32 %v512, 4294901760
    %v717 = vsub.f32 %v512, %v716
    %v718 = vand.u32 %v717, 4294901760
    %v719 = vsub.f32 %v717, %v718
    %v720 = vand.u32 %v719, 4294901760
    %721 = vmatpush1.msra.mxu0 %v720
    %722 = vmatprep.subr.mxu0 0.0
    %v723 = vand.u32 %v511, 4294901760
    %v724 = vsub.f32 %v511, %v723
    %v725 = vand.u32 %v724, 4294901760
    %v726 = vsub.f32 %v724, %v725
    %v727 = vand.u32 %v726, 4294901760
    %728 = vmatpush1.msra.mxu0 %v727
    %729 = vmatprep.subr.mxu0 0.0
    %v730 = vand.u32 %v510, 4294901760
    %v731 = vsub.f32 %v510, %v730
    %v732 = vand.u32 %v731, 4294901760
    %v733 = vsub.f32 %v731, %v732
    %v734 = vand.u32 %v733, 4294901760
    %735 = vmatpush1.msra.mxu0 %v734
    %736 = vmatprep.subr.mxu0 0.0
    %737 = vmatpush2.msra.mxu0 0.0
    %738 = vmatprep.subr.mxu0 0.0
    %739 = vmatpush2.msra.mxu0 0.0
    %740 = vmatprep.subr.mxu0 0.0
    %741 = vmatpush2.msra.mxu0 0.0
    %742 = vmatprep.subr.mxu0 0.0
    %743 = vmatpush2.msra.mxu0 0.0
    %744 = vmatprep.subr.mxu0 0.0
    %745 = vmatpush2.msra.mxu0 0.0
    %746 = vmatprep.subr.mxu0 0.0
    %747 = vmatpush2.msra.mxu0 0.0
    %748 = vmatprep.subr.mxu0 0.0
    %749 = vmatpush2.msra.mxu0 0.0
    %750 = vmatprep.subr.mxu0 0.0
    %751 = vmatpush2.msra.mxu0 0.0
    %752 = vmatprep.subr.mxu0 0.0
    %753 = vmatpush2.msra.mxu0 0.0
    %754 = vmatprep.subr.mxu0 0.0
    %755 = vmatpush2.msra.mxu0 0.0
    %756 = vmatprep.subr.mxu0 0.0
    %757 = vmatpush2.msra.mxu0 0.0
    %758 = vmatprep.subr.mxu0 0.0
    %759 = vmatpush2.msra.mxu0 0.0
    %760 = vmatprep.subr.mxu0 0.0
    %761 = vmatpush2.msra.mxu0 0.0
    %762 = vmatprep.subr.mxu0 0.0
    %763 = vmatpush2.msra.mxu0 0.0
    %764 = vmatprep.subr.mxu0 0.0
    %765 = vmatpush2.msra.mxu0 0.0
    %766 = vmatprep.subr.mxu0 0.0
    %767 = vmatpush2.msra.mxu0 0.0
    %768 = vmatprep.mubr.f32.mxu0 0.0
    %v769 = vand.u32 %v509, 4294901760
    %770 = vmatmul.mubr.f32.gmra.mxu0 %v769
    %v771 = vpop.f32.mrf.mxu0
    %v772 = vadd.f32 %v621, %v771
    %v773 = vpop.f32.mrf.mxu0
    %774 = vdwg.mxu0
    %775 = vmatprep.subr.mxu0 0.0
    %v776 = vand.u32 %v525, 4294901760
    %v777 = vsub.f32 %v525, %v776
    %778 = vmatpush1.msra.mxu0 %v777
    %779 = vmatprep.subr.mxu0 0.0
    %v780 = vand.u32 %v524, 4294901760
    %v781 = vsub.f32 %v524, %v780
    %782 = vmatpush1.msra.mxu0 %v781
    %783 = vmatprep.subr.mxu0 0.0
    %v784 = vand.u32 %v523, 4294901760
    %v785 = vsub.f32 %v523, %v784
    %786 = vmatpush1.msra.mxu0 %v785
    %787 = vmatprep.subr.mxu0 0.0
    %v788 = vand.u32 %v522, 4294901760
    %v789 = vsub.f32 %v522, %v788
    %790 = vmatpush1.msra.mxu0 %v789
    %791 = vmatprep.subr.mxu0 0.0
    %v792 = vand.u32 %v521, 4294901760
    %v793 = vsub.f32 %v521, %v792
    %794 = vmatpush1.msra.mxu0 %v793
    %795 = vmatprep.subr.mxu0 0.0
    %v796 = vand.u32 %v520, 4294901760
    %v797 = vsub.f32 %v520, %v796
    %798 = vmatpush1.msra.mxu0 %v797
    %799 = vmatprep.subr.mxu0 0.0
    %v800 = vand.u32 %v519, 4294901760
    %v801 = vsub.f32 %v519, %v800
    %802 = vmatpush1.msra.mxu0 %v801
    %803 = vmatprep.subr.mxu0 0.0
    %v804 = vand.u32 %v518, 4294901760
    %v805 = vsub.f32 %v518, %v804
    %806 = vmatpush1.msra.mxu0 %v805
    %807 = vmatprep.subr.mxu0 0.0
    %v808 = vand.u32 %v517, 4294901760
    %v809 = vsub.f32 %v517, %v808
    %810 = vmatpush1.msra.mxu0 %v809
    %811 = vmatprep.subr.mxu0 0.0
    %v812 = vand.u32 %v516, 4294901760
    %v813 = vsub.f32 %v516, %v812
    %814 = vmatpush1.msra.mxu0 %v813
    %815 = vmatprep.subr.mxu0 0.0
    %v816 = vand.u32 %v515, 4294901760
    %v817 = vsub.f32 %v515, %v816
    %818 = vmatpush1.msra.mxu0 %v817
    %819 = vmatprep.subr.mxu0 0.0
    %v820 = vand.u32 %v514, 4294901760
    %v821 = vsub.f32 %v514, %v820
    %822 = vmatpush1.msra.mxu0 %v821
    %823 = vmatprep.subr.mxu0 0.0
    %v824 = vand.u32 %v513, 4294901760
    %v825 = vsub.f32 %v513, %v824
    %826 = vmatpush1.msra.mxu0 %v825
    %827 = vmatprep.subr.mxu0 0.0
    %v828 = vand.u32 %v512, 4294901760
    %v829 = vsub.f32 %v512, %v828
    %830 = vmatpush1.msra.mxu0 %v829
    %831 = vmatprep.subr.mxu0 0.0
    %v832 = vand.u32 %v511, 4294901760
    %v833 = vsub.f32 %v511, %v832
    %834 = vmatpush1.msra.mxu0 %v833
    %835 = vmatprep.subr.mxu0 0.0
    %v836 = vand.u32 %v510, 4294901760
    %v837 = vsub.f32 %v510, %v836
    %838 = vmatpush1.msra.mxu0 %v837
    %839 = vmatprep.subr.mxu0 0.0
    %840 = vmatpush2.msra.mxu0 0.0
    %841 = vmatprep.subr.mxu0 0.0
    %842 = vmatpush2.msra.mxu0 0.0
    %843 = vmatprep.subr.mxu0 0.0
    %844 = vmatpush2.msra.mxu0 0.0
    %845 = vmatprep.subr.mxu0 0.0
    %846 = vmatpush2.msra.mxu0 0.0
    %847 = vmatprep.subr.mxu0 0.0
    %848 = vmatpush2.msra.mxu0 0.0
    %849 = vmatprep.subr.mxu0 0.0
    %850 = vmatpush2.msra.mxu0 0.0
    %851 = vmatprep.subr.mxu0 0.0
    %852 = vmatpush2.msra.mxu0 0.0
    %853 = vmatprep.subr.mxu0 0.0
    %854 = vmatpush2.msra.mxu0 0.0
    %855 = vmatprep.subr.mxu0 0.0
    %856 = vmatpush2.msra.mxu0 0.0
    %857 = vmatprep.subr.mxu0 0.0
    %858 = vmatpush2.msra.mxu0 0.0
    %859 = vmatprep.subr.mxu0 0.0
    %860 = vmatpush2.msra.mxu0 0.0
    %861 = vmatprep.subr.mxu0 0.0
    %862 = vmatpush2.msra.mxu0 0.0
    %863 = vmatprep.subr.mxu0 0.0
    %864 = vmatpush2.msra.mxu0 0.0
    %865 = vmatprep.subr.mxu0 0.0
    %866 = vmatpush2.msra.mxu0 0.0
    %867 = vmatprep.subr.mxu0 0.0
    %868 = vmatpush2.msra.mxu0 0.0
    %869 = vmatprep.subr.mxu0 0.0
    %870 = vmatpush2.msra.mxu0 0.0
    %871 = vmatprep.mubr.f32.mxu0 0.0
    %v872 = vand.u32 %v509, 4294901760
    %v873 = vsub.f32 %v509, %v872
    %874 = vmatmul.mubr.f32.gmra.mxu0 %v873
    %v875 = vpop.f32.mrf.mxu0
    %v876 = vadd.f32 %v772, %v875
    %v877 = vpop.f32.mrf.mxu0
    %878 = vdwg.mxu0
    %879 = vmatprep.subr.mxu0 0.0
    %v880 = vand.u32 %v525, 4294901760
    %881 = vmatpush1.msra.mxu0 %v880
    %882 = vmatprep.subr.mxu0 0.0
    %v883 = vand.u32 %v524, 4294901760
    %884 = vmatpush1.msra.mxu0 %v883
    %885 = vmatprep.subr.mxu0 0.0
    %v886 = vand.u32 %v523, 4294901760
    %887 = vmatpush1.msra.mxu0 %v886
    %888 = vmatprep.subr.mxu0 0.0
    %v889 = vand.u32 %v522, 4294901760
    %890 = vmatpush1.msra.mxu0 %v889
    %891 = vmatprep.subr.mxu0 0.0
    %v892 = vand.u32 %v521, 4294901760
    %893 = vmatpush1.msra.mxu0 %v892
    %894 = vmatprep.subr.mxu0 0.0
    %v895 = vand.u32 %v520, 4294901760
    %896 = vmatpush1.msra.mxu0 %v895
    %897 = vmatprep.subr.mxu0 0.0
    %v898 = vand.u32 %v519, 4294901760
    %899 = vmatpush1.msra.mxu0 %v898
    %900 = vmatprep.subr.mxu0 0.0
    %v901 = vand.u32 %v518, 4294901760
    %902 = vmatpush1.msra.mxu0 %v901
    %903 = vmatprep.subr.mxu0 0.0
    %v904 = vand.u32 %v517, 4294901760
    %905 = vmatpush1.msra.mxu0 %v904
    %906 = vmatprep.subr.mxu0 0.0
    %v907 = vand.u32 %v516, 4294901760
    %908 = vmatpush1.msra.mxu0 %v907
    %909 = vmatprep.subr.mxu0 0.0
    %v910 = vand.u32 %v515, 4294901760
    %911 = vmatpush1.msra.mxu0 %v910
    %912 = vmatprep.subr.mxu0 0.0
    %v913 = vand.u32 %v514, 4294901760
    %914 = vmatpush1.msra.mxu0 %v913
    %915 = vmatprep.subr.mxu0 0.0
    %v916 = vand.u32 %v513, 4294901760
    %917 = vmatpush1.msra.mxu0 %v916
    %918 = vmatprep.subr.mxu0 0.0
    %v919 = vand.u32 %v512, 4294901760
    %920 = vmatpush1.msra.mxu0 %v919
    %921 = vmatprep.subr.mxu0 0.0
    %v922 = vand.u32 %v511, 4294901760
    %923 = vmatpush1.msra.mxu0 %v922
    %924 = vmatprep.subr.mxu0 0.0
    %v925 = vand.u32 %v510, 4294901760
    %926 = vmatpush1.msra.mxu0 %v925
    %927 = vmatprep.subr.mxu0 0.0
    %928 = vmatpush2.msra.mxu0 0.0
    %929 = vmatprep.subr.mxu0 0.0
    %930 = vmatpush2.msra.mxu0 0.0
    %931 = vmatprep.subr.mxu0 0.0
    %932 = vmatpush2.msra.mxu0 0.0
    %933 = vmatprep.subr.mxu0 0.0
    %934 = vmatpush2.msra.mxu0 0.0
    %935 = vmatprep.subr.mxu0 0.0
    %936 = vmatpush2.msra.mxu0 0.0
    %937 = vmatprep.subr.mxu0 0.0
    %938 = vmatpush2.msra.mxu0 0.0
    %939 = vmatprep.subr.mxu0 0.0
    %940 = vmatpush2.msra.mxu0 0.0
    %941 = vmatprep.subr.mxu0 0.0
    %942 = vmatpush2.msra.mxu0 0.0
    %943 = vmatprep.subr.mxu0 0.0
    %944 = vmatpush2.msra.mxu0 0.0
    %945 = vmatprep.subr.mxu0 0.0
    %946 = vmatpush2.msra.mxu0 0.0
    %947 = vmatprep.subr.mxu0 0.0
    %948 = vmatpush2.msra.mxu0 0.0
    %949 = vmatprep.subr.mxu0 0.0
    %950 = vmatpush2.msra.mxu0 0.0
    %951 = vmatprep.subr.mxu0 0.0
    %952 = vmatpush2.msra.mxu0 0.0
    %953 = vmatprep.subr.mxu0 0.0
    %954 = vmatpush2.msra.mxu0 0.0
    %955 = vmatprep.subr.mxu0 0.0
    %956 = vmatpush2.msra.mxu0 0.0
    %957 = vmatprep.subr.mxu0 0.0
    %958 = vmatpush2.msra.mxu0 0.0
    %959 = vmatprep.mubr.f32.mxu0 0.0
    %v960 = vand.u32 %v509, 4294901760
    %v961 = vsub.f32 %v509, %v960
    %v962 = vand.u32 %v961, 4294901760
    %963 = vmatmul.mubr.f32.gmra.mxu0 %v962
    %v964 = vpop.f32.mrf.mxu0
    %v965 = vadd.f32 %v876, %v964
    %v966 = vpop.f32.mrf.mxu0
    %967 = vdwg.mxu0
    %968 = vmatprep.subr.mxu0 0.0
    %v969 = vand.u32 %v525, 4294901760
    %v970 = vsub.f32 %v525, %v969
    %v971 = vand.u32 %v970, 4294901760
    %972 = vmatpush1.msra.mxu0 %v971
    %973 = vmatprep.subr.mxu0 0.0
    %v974 = vand.u32 %v524, 4294901760
    %v975 = vsub.f32 %v524, %v974
    %v976 = vand.u32 %v975, 4294901760
    %977 = vmatpush1.msra.mxu0 %v976
    %978 = vmatprep.subr.mxu0 0.0
    %v979 = vand.u32 %v523, 4294901760
    %v980 = vsub.f32 %v523, %v979
    %v981 = vand.u32 %v980, 4294901760
    %982 = vmatpush1.msra.mxu0 %v981
    %983 = vmatprep.subr.mxu0 0.0
    %v984 = vand.u32 %v522, 4294901760
    %v985 = vsub.f32 %v522, %v984
    %v986 = vand.u32 %v985, 4294901760
    %987 = vmatpush1.msra.mxu0 %v986
    %988 = vmatprep.subr.mxu0 0.0
    %v989 = vand.u32 %v521, 4294901760
    %v990 = vsub.f32 %v521, %v989
    %v991 = vand.u32 %v990, 4294901760
    %992 = vmatpush1.msra.mxu0 %v991
    %993 = vmatprep.subr.mxu0 0.0
    %v994 = vand.u32 %v520, 4294901760
    %v995 = vsub.f32 %v520, %v994
    %v996 = vand.u32 %v995, 4294901760
    %997 = vmatpush1.msra.mxu0 %v996
    %998 = vmatprep.subr.mxu0 0.0
    %v999 = vand.u32 %v519, 4294901760
    %v1000 = vsub.f32 %v519, %v999
    %v1001 = vand.u32 %v1000, 4294901760
    %1002 = vmatpush1.msra.mxu0 %v1001
    %1003 = vmatprep.subr.mxu0 0.0
    %v1004 = vand.u32 %v518, 4294901760
    %v1005 = vsub.f32 %v518, %v1004
    %v1006 = vand.u32 %v1005, 4294901760
    %1007 = vmatpush1.msra.mxu0 %v1006
    %1008 = vmatprep.subr.mxu0 0.0
    %v1009 = vand.u32 %v517, 4294901760
    %v1010 = vsub.f32 %v517, %v1009
    %v1011 = vand.u32 %v1010, 4294901760
    %1012 = vmatpush1.msra.mxu0 %v1011
    %1013 = vmatprep.subr.mxu0 0.0
    %v1014 = vand.u32 %v516, 4294901760
    %v1015 = vsub.f32 %v516, %v1014
    %v1016 = vand.u32 %v1015, 4294901760
    %1017 = vmatpush1.msra.mxu0 %v1016
    %1018 = vmatprep.subr.mxu0 0.0
    %v1019 = vand.u32 %v515, 4294901760
    %v1020 = vsub.f32 %v515, %v1019
    %v1021 = vand.u32 %v1020, 4294901760
    %1022 = vmatpush1.msra.mxu0 %v1021
    %1023 = vmatprep.subr.mxu0 0.0
    %v1024 = vand.u32 %v514, 4294901760
    %v1025 = vsub.f32 %v514, %v1024
    %v1026 = vand.u32 %v1025, 4294901760
    %1027 = vmatpush1.msra.mxu0 %v1026
    %1028 = vmatprep.subr.mxu0 0.0
    %v1029 = vand.u32 %v513, 4294901760
    %v1030 = vsub.f32 %v513, %v1029
    %v1031 = vand.u32 %v1030, 4294901760
    %1032 = vmatpush1.msra.mxu0 %v1031
    %1033 = vmatprep.subr.mxu0 0.0
    %v1034 = vand.u32 %v512, 4294901760
    %v1035 = vsub.f32 %v512, %v1034
    %v1036 = vand.u32 %v1035, 4294901760
    %1037 = vmatpush1.msra.mxu0 %v1036
    %1038 = vmatprep.subr.mxu0 0.0
    %v1039 = vand.u32 %v511, 4294901760
    %v1040 = vsub.f32 %v511, %v1039
    %v1041 = vand.u32 %v1040, 4294901760
    %1042 = vmatpush1.msra.mxu0 %v1041
    %1043 = vmatprep.subr.mxu0 0.0
    %v1044 = vand.u32 %v510, 4294901760
    %v1045 = vsub.f32 %v510, %v1044
    %v1046 = vand.u32 %v1045, 4294901760
    %1047 = vmatpush1.msra.mxu0 %v1046
    %1048 = vmatprep.subr.mxu0 0.0
    %1049 = vmatpush2.msra.mxu0 0.0
    %1050 = vmatprep.subr.mxu0 0.0
    %1051 = vmatpush2.msra.mxu0 0.0
    %1052 = vmatprep.subr.mxu0 0.0
    %1053 = vmatpush2.msra.mxu0 0.0
    %1054 = vmatprep.subr.mxu0 0.0
    %1055 = vmatpush2.msra.mxu0 0.0
    %1056 = vmatprep.subr.mxu0 0.0
    %1057 = vmatpush2.msra.mxu0 0.0
    %1058 = vmatprep.subr.mxu0 0.0
    %1059 = vmatpush2.msra.mxu0 0.0
    %1060 = vmatprep.subr.mxu0 0.0
    %1061 = vmatpush2.msra.mxu0 0.0
    %1062 = vmatprep.subr.mxu0 0.0
    %1063 = vmatpush2.msra.mxu0 0.0
    %1064 = vmatprep.subr.mxu0 0.0
    %1065 = vmatpush2.msra.mxu0 0.0
    %1066 = vmatprep.subr.mxu0 0.0
    %1067 = vmatpush2.msra.mxu0 0.0
    %1068 = vmatprep.subr.mxu0 0.0
    %1069 = vmatpush2.msra.mxu0 0.0
    %1070 = vmatprep.subr.mxu0 0.0
    %1071 = vmatpush2.msra.mxu0 0.0
    %1072 = vmatprep.subr.mxu0 0.0
    %1073 = vmatpush2.msra.mxu0 0.0
    %1074 = vmatprep.subr.mxu0 0.0
    %1075 = vmatpush2.msra.mxu0 0.0
    %1076 = vmatprep.subr.mxu0 0.0
    %1077 = vmatpush2.msra.mxu0 0.0
    %1078 = vmatprep.subr.mxu0 0.0
    %1079 = vmatpush2.msra.mxu0 0.0
    %1080 = vmatprep.mubr.f32.mxu0 0.0
    %v1081 = vand.u32 %v509, 4294901760
    %1082 = vmatmul.mubr.f32.gmra.mxu0 %v1081
    %v1083 = vpop.f32.mrf.mxu0
    %v1084 = vadd.f32 %v965, %v1083
    %v1085 = vpop.f32.mrf.mxu0
    %1086 = vdwg.mxu0
    %1087 = vmatprep.subr.mxu0 0.0
    %v1088 = vand.u32 %v525, 4294901760
    %1089 = vmatpush1.msra.mxu0 %v1088
    %1090 = vmatprep.subr.mxu0 0.0
    %v1091 = vand.u32 %v524, 4294901760
    %1092 = vmatpush1.msra.mxu0 %v1091
    %1093 = vmatprep.subr.mxu0 0.0
    %v1094 = vand.u32 %v523, 4294901760
    %1095 = vmatpush1.msra.mxu0 %v1094
    %1096 = vmatprep.subr.mxu0 0.0
    %v1097 = vand.u32 %v522, 4294901760
    %1098 = vmatpush1.msra.mxu0 %v1097
    %1099 = vmatprep.subr.mxu0 0.0
    %v1100 = vand.u32 %v521, 4294901760
    %1101 = vmatpush1.msra.mxu0 %v1100
    %1102 = vmatprep.subr.mxu0 0.0
    %v1103 = vand.u32 %v520, 4294901760
    %1104 = vmatpush1.msra.mxu0 %v1103
    %1105 = vmatprep.subr.mxu0 0.0
    %v1106 = vand.u32 %v519, 4294901760
    %1107 = vmatpush1.msra.mxu0 %v1106
    %1108 = vmatprep.subr.mxu0 0.0
    %v1109 = vand.u32 %v518, 4294901760
    %1110 = vmatpush1.msra.mxu0 %v1109
    %1111 = vmatprep.subr.mxu0 0.0
    %v1112 = vand.u32 %v517, 4294901760
    %1113 = vmatpush1.msra.mxu0 %v1112
    %1114 = vmatprep.subr.mxu0 0.0
    %v1115 = vand.u32 %v516, 4294901760
    %1116 = vmatpush1.msra.mxu0 %v1115
    %1117 = vmatprep.subr.mxu0 0.0
    %v1118 = vand.u32 %v515, 4294901760
    %1119 = vmatpush1.msra.mxu0 %v1118
    %1120 = vmatprep.subr.mxu0 0.0
    %v1121 = vand.u32 %v514, 4294901760
    %1122 = vmatpush1.msra.mxu0 %v1121
    %1123 = vmatprep.subr.mxu0 0.0
    %v1124 = vand.u32 %v513, 4294901760
    %1125 = vmatpush1.msra.mxu0 %v1124
    %1126 = vmatprep.subr.mxu0 0.0
    %v1127 = vand.u32 %v512, 4294901760
    %1128 = vmatpush1.msra.mxu0 %v1127
    %1129 = vmatprep.subr.mxu0 0.0
    %v1130 = vand.u32 %v511, 4294901760
    %1131 = vmatpush1.msra.mxu0 %v1130
    %1132 = vmatprep.subr.mxu0 0.0
    %v1133 = vand.u32 %v510, 4294901760
    %1134 = vmatpush1.msra.mxu0 %v1133
    %1135 = vmatprep.subr.mxu0 0.0
    %1136 = vmatpush2.msra.mxu0 0.0
    %1137 = vmatprep.subr.mxu0 0.0
    %1138 = vmatpush2.msra.mxu0 0.0
    %1139 = vmatprep.subr.mxu0 0.0
    %1140 = vmatpush2.msra.mxu0 0.0
    %1141 = vmatprep.subr.mxu0 0.0
    %1142 = vmatpush2.msra.mxu0 0.0
    %1143 = vmatprep.subr.mxu0 0.0
    %1144 = vmatpush2.msra.mxu0 0.0
    %1145 = vmatprep.subr.mxu0 0.0
    %1146 = vmatpush2.msra.mxu0 0.0
    %1147 = vmatprep.subr.mxu0 0.0
    %1148 = vmatpush2.msra.mxu0 0.0
    %1149 = vmatprep.subr.mxu0 0.0
    %1150 = vmatpush2.msra.mxu0 0.0
    %1151 = vmatprep.subr.mxu0 0.0
    %1152 = vmatpush2.msra.mxu0 0.0
    %1153 = vmatprep.subr.mxu0 0.0
    %1154 = vmatpush2.msra.mxu0 0.0
    %1155 = vmatprep.subr.mxu0 0.0
    %1156 = vmatpush2.msra.mxu0 0.0
    %1157 = vmatprep.subr.mxu0 0.0
    %1158 = vmatpush2.msra.mxu0 0.0
    %1159 = vmatprep.subr.mxu0 0.0
    %1160 = vmatpush2.msra.mxu0 0.0
    %1161 = vmatprep.subr.mxu0 0.0
    %1162 = vmatpush2.msra.mxu0 0.0
    %1163 = vmatprep.subr.mxu0 0.0
    %1164 = vmatpush2.msra.mxu0 0.0
    %1165 = vmatprep.subr.mxu0 0.0
    %1166 = vmatpush2.msra.mxu0 0.0
    %1167 = vmatprep.mubr.f32.mxu0 0.0
    %v1168 = vand.u32 %v509, 4294901760
    %1169 = vmatmul.mubr.f32.gmra.mxu0 %v1168
    %v1170 = vpop.f32.mrf.mxu0
    %v1171 = vadd.f32 %v1084, %v1170
    %v1172 = vpop.f32.mrf.mxu0
    %1173 = vdwg.mxu0
    %v1174 = vtanh.pop %v1171
    %v1175 = vld [vmem:[#allocation2] sm:$0xff]
    %v1176 = vld [vmem:[#allocation2 + $0x8] sm:$0xff]
    %v1177 = vld [vmem:[#allocation2 + $0x10] sm:$0xff]
    %v1178 = vld [vmem:[#allocation2 + $0x18] sm:$0xff]
    %v1179 = vld [vmem:[#allocation2 + $0x20] sm:$0xff]
    %v1180 = vld [vmem:[#allocation2 + $0x28] sm:$0xff]
    %v1181 = vld [vmem:[#allocation2 + $0x30] sm:$0xff]
    %v1182 = vld [vmem:[#allocation2 + $0x38] sm:$0xff]
    %v1183 = vld [vmem:[#allocation2 + $0x40] sm:$0xff]
    %v1184 = vld [vmem:[#allocation2 + $0x48] sm:$0xff]
    %v1185 = vld [vmem:[#allocation2 + $0x50] sm:$0xff]
    %v1186 = vld [vmem:[#allocation2 + $0x58] sm:$0xff]
    %v1187 = vld [vmem:[#allocation2 + $0x60] sm:$0xff]
    %v1188 = vld [vmem:[#allocation2 + $0x68] sm:$0xff]
    %v1189 = vld [vmem:[#allocation2 + $0x70] sm:$0xff]
    %v1190 = vld [vmem:[#allocation2 + $0x78] sm:$0xff]
    %v1191 = vld [vmem:[%s6] sm:$0x1]
    %v1193 = vlaneseq
    %v1194 = vshrl.u32 %v1193, 7
    %v1195 = vsub.s32 0, %v1194
    %v1196 = vrot.slane %v1191, %v1195
    %1198 = vmatprep.subr.mxu0 0.0
    %v1199 = vand.u32 %v1190, 4294901760
    %1200 = vmatpush1.msra.mxu0 %v1199
    %1201 = vmatprep.subr.mxu0 0.0
    %v1202 = vand.u32 %v1189, 4294901760
    %1203 = vmatpush1.msra.mxu0 %v1202
    %1204 = vmatprep.subr.mxu0 0.0
    %v1205 = vand.u32 %v1188, 4294901760
    %1206 = vmatpush1.msra.mxu0 %v1205
    %1207 = vmatprep.subr.mxu0 0.0
    %v1208 = vand.u32 %v1187, 4294901760
    %1209 = vmatpush1.msra.mxu0 %v1208
    %1210 = vmatprep.subr.mxu0 0.0
    %v1211 = vand.u32 %v1186, 4294901760
    %1212 = vmatpush1.msra.mxu0 %v1211
    %1213 = vmatprep.subr.mxu0 0.0
    %v1214 = vand.u32 %v1185, 4294901760
    %1215 = vmatpush1.msra.mxu0 %v1214
    %1216 = vmatprep.subr.mxu0 0.0
    %v1217 = vand.u32 %v1184, 4294901760
    %1218 = vmatpush1.msra.mxu0 %v1217
    %1219 = vmatprep.subr.mxu0 0.0
    %v1220 = vand.u32 %v1183, 4294901760
    %1221 = vmatpush1.msra.mxu0 %v1220
    %1222 = vmatprep.subr.mxu0 0.0
    %v1223 = vand.u32 %v1182, 4294901760
    %1224 = vmatpush1.msra.mxu0 %v1223
    %1225 = vmatprep.subr.mxu0 0.0
    %v1226 = vand.u32 %v1181, 4294901760
    %1227 = vmatpush1.msra.mxu0 %v1226
    %1228 = vmatprep.subr.mxu0 0.0
    %v1229 = vand.u32 %v1180, 4294901760
    %1230 = vmatpush1.msra.mxu0 %v1229
    %1231 = vmatprep.subr.mxu0 0.0
    %v1232 = vand.u32 %v1179, 4294901760
    %1233 = vmatpush1.msra.mxu0 %v1232
    %1234 = vmatprep.subr.mxu0 0.0
    %v1235 = vand.u32 %v1178, 4294901760
    %1236 = vmatpush1.msra.mxu0 %v1235
    %1237 = vmatprep.subr.mxu0 0.0
    %v1238 = vand.u32 %v1177, 4294901760
    %1239 = vmatpush1.msra.mxu0 %v1238
    %1240 = vmatprep.subr.mxu0 0.0
    %v1241 = vand.u32 %v1176, 4294901760
    %1242 = vmatpush1.msra.mxu0 %v1241
    %1243 = vmatprep.subr.mxu0 0.0
    %v1244 = vand.u32 %v1175, 4294901760
    %1245 = vmatpush1.msra.mxu0 %v1244
    %1246 = vmatprep.subr.mxu0 0.0
    %1247 = vmatpush2.msra.mxu0 0.0
    %1248 = vmatprep.subr.mxu0 0.0
    %1249 = vmatpush2.msra.mxu0 0.0
    %1250 = vmatprep.subr.mxu0 0.0
    %1251 = vmatpush2.msra.mxu0 0.0
    %1252 = vmatprep.subr.mxu0 0.0
    %1253 = vmatpush2.msra.mxu0 0.0
    %1254 = vmatprep.subr.mxu0 0.0
    %1255 = vmatpush2.msra.mxu0 0.0
    %1256 = vmatprep.subr.mxu0 0.0
    %1257 = vmatpush2.msra.mxu0 0.0
    %1258 = vmatprep.subr.mxu0 0.0
    %1259 = vmatpush2.msra.mxu0 0.0
    %1260 = vmatprep.subr.mxu0 0.0
    %1261 = vmatpush2.msra.mxu0 0.0
    %1262 = vmatprep.subr.mxu0 0.0
    %1263 = vmatpush2.msra.mxu0 0.0
    %1264 = vmatprep.subr.mxu0 0.0
    %1265 = vmatpush2.msra.mxu0 0.0
    %1266 = vmatprep.subr.mxu0 0.0
    %1267 = vmatpush2.msra.mxu0 0.0
    %1268 = vmatprep.subr.mxu0 0.0
    %1269 = vmatpush2.msra.mxu0 0.0
    %1270 = vmatprep.subr.mxu0 0.0
    %1271 = vmatpush2.msra.mxu0 0.0
    %1272 = vmatprep.subr.mxu0 0.0
    %1273 = vmatpush2.msra.mxu0 0.0
    %1274 = vmatprep.subr.mxu0 0.0
    %1275 = vmatpush2.msra.mxu0 0.0
    %1276 = vmatprep.subr.mxu0 0.0
    %1277 = vmatpush2.msra.mxu0 0.0
    %1278 = vmatprep.mubr.f32.mxu0 0.0
    %v1279 = vand.u32 %v1174, 4294901760
    %v1280 = vsub.f32 %v1174, %v1279
    %v1281 = vand.u32 %v1280, 4294901760
    %v1282 = vsub.f32 %v1280, %v1281
    %v1283 = vand.u32 %v1282, 4294901760
    %1284 = vmatmul.mubr.f32.gmra.mxu0 %v1283
    %v1285 = vpop.f32.mrf.mxu0
    %v1286 = vadd.f32 %v1196, %v1285
    %v1287 = vpop.f32.mrf.mxu0
    %1288 = vdwg.mxu0
    %1289 = vmatprep.subr.mxu0 0.0
    %v1290 = vand.u32 %v1190, 4294901760
    %v1291 = vsub.f32 %v1190, %v1290
    %v1292 = vand.u32 %v1291, 4294901760
    %v1293 = vsub.f32 %v1291, %v1292
    %v1294 = vand.u32 %v1293, 4294901760
    %1295 = vmatpush1.msra.mxu0 %v1294
    %1296 = vmatprep.subr.mxu0 0.0
    %v1297 = vand.u32 %v1189, 4294901760
    %v1298 = vsub.f32 %v1189, %v1297
    %v1299 = vand.u32 %v1298, 4294901760
    %v1300 = vsub.f32 %v1298, %v1299
    %v1301 = vand.u32 %v1300, 4294901760
    %1302 = vmatpush1.msra.mxu0 %v1301
    %1303 = vmatprep.subr.mxu0 0.0
    %v1304 = vand.u32 %v1188, 4294901760
    %v1305 = vsub.f32 %v1188, %v1304
    %v1306 = vand.u32 %v1305, 4294901760
    %v1307 = vsub.f32 %v1305, %v1306
    %v1308 = vand.u32 %v1307, 4294901760
    %1309 = vmatpush1.msra.mxu0 %v1308
    %1310 = vmatprep.subr.mxu0 0.0
    %v1311 = vand.u32 %v1187, 4294901760
    %v1312 = vsub.f32 %v1187, %v1311
    %v1313 = vand.u32 %v1312, 4294901760
    %v1314 = vsub.f32 %v1312, %v1313
    %v1315 = vand.u32 %v1314, 4294901760
    %1316 = vmatpush1.msra.mxu0 %v1315
    %1317 = vmatprep.subr.mxu0 0.0
    %v1318 = vand.u32 %v1186, 4294901760
    %v1319 = vsub.f32 %v1186, %v1318
    %v1320 = vand.u32 %v1319, 4294901760
    %v1321 = vsub.f32 %v1319, %v1320
    %v1322 = vand.u32 %v1321, 4294901760
    %1323 = vmatpush1.msra.mxu0 %v1322
    %1324 = vmatprep.subr.mxu0 0.0
    %v1325 = vand.u32 %v1185, 4294901760
    %v1326 = vsub.f32 %v1185, %v1325
    %v1327 = vand.u32 %v1326, 4294901760
    %v1328 = vsub.f32 %v1326, %v1327
    %v1329 = vand.u32 %v1328, 4294901760
    %1330 = vmatpush1.msra.mxu0 %v1329
    %1331 = vmatprep.subr.mxu0 0.0
    %v1332 = vand.u32 %v1184, 4294901760
    %v1333 = vsub.f32 %v1184, %v1332
    %v1334 = vand.u32 %v1333, 4294901760
    %v1335 = vsub.f32 %v1333, %v1334
    %v1336 = vand.u32 %v1335, 4294901760
    %1337 = vmatpush1.msra.mxu0 %v1336
    %1338 = vmatprep.subr.mxu0 0.0
    %v1339 = vand.u32 %v1183, 4294901760
    %v1340 = vsub.f32 %v1183, %v1339
    %v1341 = vand.u32 %v1340, 4294901760
    %v1342 = vsub.f32 %v1340, %v1341
    %v1343 = vand.u32 %v1342, 4294901760
    %1344 = vmatpush1.msra.mxu0 %v1343
    %1345 = vmatprep.subr.mxu0 0.0
    %v1346 = vand.u32 %v1182, 4294901760
    %v1347 = vsub.f32 %v1182, %v1346
    %v1348 = vand.u32 %v1347, 4294901760
    %v1349 = vsub.f32 %v1347, %v1348
    %v1350 = vand.u32 %v1349, 4294901760
    %1351 = vmatpush1.msra.mxu0 %v1350
    %1352 = vmatprep.subr.mxu0 0.0
    %v1353 = vand.u32 %v1181, 4294901760
    %v1354 = vsub.f32 %v1181, %v1353
    %v1355 = vand.u32 %v1354, 4294901760
    %v1356 = vsub.f32 %v1354, %v1355
    %v1357 = vand.u32 %v1356, 4294901760
    %1358 = vmatpush1.msra.mxu0 %v1357
    %1359 = vmatprep.subr.mxu0 0.0
    %v1360 = vand.u32 %v1180, 4294901760
    %v1361 = vsub.f32 %v1180, %v1360
    %v1362 = vand.u32 %v1361, 4294901760
    %v1363 = vsub.f32 %v1361, %v1362
    %v1364 = vand.u32 %v1363, 4294901760
    %1365 = vmatpush1.msra.mxu0 %v1364
    %1366 = vmatprep.subr.mxu0 0.0
    %v1367 = vand.u32 %v1179, 4294901760
    %v1368 = vsub.f32 %v1179, %v1367
    %v1369 = vand.u32 %v1368, 4294901760
    %v1370 = vsub.f32 %v1368, %v1369
    %v1371 = vand.u32 %v1370, 4294901760
    %1372 = vmatpush1.msra.mxu0 %v1371
    %1373 = vmatprep.subr.mxu0 0.0
    %v1374 = vand.u32 %v1178, 4294901760
    %v1375 = vsub.f32 %v1178, %v1374
    %v1376 = vand.u32 %v1375, 4294901760
    %v1377 = vsub.f32 %v1375, %v1376
    %v1378 = vand.u32 %v1377, 4294901760
    %1379 = vmatpush1.msra.mxu0 %v1378
    %1380 = vmatprep.subr.mxu0 0.0
    %v1381 = vand.u32 %v1177, 4294901760
    %v1382 = vsub.f32 %v1177, %v1381
    %v1383 = vand.u32 %v1382, 4294901760
    %v1384 = vsub.f32 %v1382, %v1383
    %v1385 = vand.u32 %v1384, 4294901760
    %1386 = vmatpush1.msra.mxu0 %v1385
    %1387 = vmatprep.subr.mxu0 0.0
    %v1388 = vand.u32 %v1176, 4294901760
    %v1389 = vsub.f32 %v1176, %v1388
    %v1390 = vand.u32 %v1389, 4294901760
    %v1391 = vsub.f32 %v1389, %v1390
    %v1392 = vand.u32 %v1391, 4294901760
    %1393 = vmatpush1.msra.mxu0 %v1392
    %1394 = vmatprep.subr.mxu0 0.0
    %v1395 = vand.u32 %v1175, 4294901760
    %v1396 = vsub.f32 %v1175, %v1395
    %v1397 = vand.u32 %v1396, 4294901760
    %v1398 = vsub.f32 %v1396, %v1397
    %v1399 = vand.u32 %v1398, 4294901760
    %1400 = vmatpush1.msra.mxu0 %v1399
    %1401 = vmatprep.subr.mxu0 0.0
    %1402 = vmatpush2.msra.mxu0 0.0
    %1403 = vmatprep.subr.mxu0 0.0
    %1404 = vmatpush2.msra.mxu0 0.0
    %1405 = vmatprep.subr.mxu0 0.0
    %1406 = vmatpush2.msra.mxu0 0.0
    %1407 = vmatprep.subr.mxu0 0.0
    %1408 = vmatpush2.msra.mxu0 0.0
    %1409 = vmatprep.subr.mxu0 0.0
    %1410 = vmatpush2.msra.mxu0 0.0
    %1411 = vmatprep.subr.mxu0 0.0
    %1412 = vmatpush2.msra.mxu0 0.0
    %1413 = vmatprep.subr.mxu0 0.0
    %1414 = vmatpush2.msra.mxu0 0.0
    %1415 = vmatprep.subr.mxu0 0.0
    %1416 = vmatpush2.msra.mxu0 0.0
    %1417 = vmatprep.subr.mxu0 0.0
    %1418 = vmatpush2.msra.mxu0 0.0
    %1419 = vmatprep.subr.mxu0 0.0
    %1420 = vmatpush2.msra.mxu0 0.0
    %1421 = vmatprep.subr.mxu0 0.0
    %1422 = vmatpush2.msra.mxu0 0.0
    %1423 = vmatprep.subr.mxu0 0.0
    %1424 = vmatpush2.msra.mxu0 0.0
    %1425 = vmatprep.subr.mxu0 0.0
    %1426 = vmatpush2.msra.mxu0 0.0
    %1427 = vmatprep.subr.mxu0 0.0
    %1428 = vmatpush2.msra.mxu0 0.0
    %1429 = vmatprep.subr.mxu0 0.0
    %1430 = vmatpush2.msra.mxu0 0.0
    %1431 = vmatprep.subr.mxu0 0.0
    %1432 = vmatpush2.msra.mxu0 0.0
    %1433 = vmatprep.mubr.f32.mxu0 0.0
    %v1434 = vand.u32 %v1174, 4294901760
    %1435 = vmatmul.mubr.f32.gmra.mxu0 %v1434
    %v1436 = vpop.f32.mrf.mxu0
    %v1437 = vadd.f32 %v1286, %v1436
    %v1438 = vpop.f32.mrf.mxu0
    %1439 = vdwg.mxu0
    %1440 = vmatprep.subr.mxu0 0.0
    %v1441 = vand.u32 %v1190, 4294901760
    %v1442 = vsub.f32 %v1190, %v1441
    %1443 = vmatpush1.msra.mxu0 %v1442
    %1444 = vmatprep.subr.mxu0 0.0
    %v1445 = vand.u32 %v1189, 4294901760
    %v1446 = vsub.f32 %v1189, %v1445
    %1447 = vmatpush1.msra.mxu0 %v1446
    %1448 = vmatprep.subr.mxu0 0.0
    %v1449 = vand.u32 %v1188, 4294901760
    %v1450 = vsub.f32 %v1188, %v1449
    %1451 = vmatpush1.msra.mxu0 %v1450
    %1452 = vmatprep.subr.mxu0 0.0
    %v1453 = vand.u32 %v1187, 4294901760
    %v1454 = vsub.f32 %v1187, %v1453
    %1455 = vmatpush1.msra.mxu0 %v1454
    %1456 = vmatprep.subr.mxu0 0.0
    %v1457 = vand.u32 %v1186, 4294901760
    %v1458 = vsub.f32 %v1186, %v1457
    %1459 = vmatpush1.msra.mxu0 %v1458
    %1460 = vmatprep.subr.mxu0 0.0
    %v1461 = vand.u32 %v1185, 4294901760
    %v1462 = vsub.f32 %v1185, %v1461
    %1463 = vmatpush1.msra.mxu0 %v1462
    %1464 = vmatprep.subr.mxu0 0.0
    %v1465 = vand.u32 %v1184, 4294901760
    %v1466 = vsub.f32 %v1184, %v1465
    %1467 = vmatpush1.msra.mxu0 %v1466
    %1468 = vmatprep.subr.mxu0 0.0
    %v1469 = vand.u32 %v1183, 4294901760
    %v1470 = vsub.f32 %v1183, %v1469
    %1471 = vmatpush1.msra.mxu0 %v1470
    %1472 = vmatprep.subr.mxu0 0.0
    %v1473 = vand.u32 %v1182, 4294901760
    %v1474 = vsub.f32 %v1182, %v1473
    %1475 = vmatpush1.msra.mxu0 %v1474
    %1476 = vmatprep.subr.mxu0 0.0
    %v1477 = vand.u32 %v1181, 4294901760
    %v1478 = vsub.f32 %v1181, %v1477
    %1479 = vmatpush1.msra.mxu0 %v1478
    %1480 = vmatprep.subr.mxu0 0.0
    %v1481 = vand.u32 %v1180, 4294901760
    %v1482 = vsub.f32 %v1180, %v1481
    %1483 = vmatpush1.msra.mxu0 %v1482
    %1484 = vmatprep.subr.mxu0 0.0
    %v1485 = vand.u32 %v1179, 4294901760
    %v1486 = vsub.f32 %v1179, %v1485
    %1487 = vmatpush1.msra.mxu0 %v1486
    %1488 = vmatprep.subr.mxu0 0.0
    %v1489 = vand.u32 %v1178, 4294901760
    %v1490 = vsub.f32 %v1178, %v1489
    %1491 = vmatpush1.msra.mxu0 %v1490
    %1492 = vmatprep.subr.mxu0 0.0
    %v1493 = vand.u32 %v1177, 4294901760
    %v1494 = vsub.f32 %v1177, %v1493
    %1495 = vmatpush1.msra.mxu0 %v1494
    %1496 = vmatprep.subr.mxu0 0.0
    %v1497 = vand.u32 %v1176, 4294901760
    %v1498 = vsub.f32 %v1176, %v1497
    %1499 = vmatpush1.msra.mxu0 %v1498
    %1500 = vmatprep.subr.mxu0 0.0
    %v1501 = vand.u32 %v1175, 4294901760
    %v1502 = vsub.f32 %v1175, %v1501
    %1503 = vmatpush1.msra.mxu0 %v1502
    %1504 = vmatprep.subr.mxu0 0.0
    %1505 = vmatpush2.msra.mxu0 0.0
    %1506 = vmatprep.subr.mxu0 0.0
    %1507 = vmatpush2.msra.mxu0 0.0
    %1508 = vmatprep.subr.mxu0 0.0
    %1509 = vmatpush2.msra.mxu0 0.0
    %1510 = vmatprep.subr.mxu0 0.0
    %1511 = vmatpush2.msra.mxu0 0.0
    %1512 = vmatprep.subr.mxu0 0.0
    %1513 = vmatpush2.msra.mxu0 0.0
    %1514 = vmatprep.subr.mxu0 0.0
    %1515 = vmatpush2.msra.mxu0 0.0
    %1516 = vmatprep.subr.mxu0 0.0
    %1517 = vmatpush2.msra.mxu0 0.0
    %1518 = vmatprep.subr.mxu0 0.0
    %1519 = vmatpush2.msra.mxu0 0.0
    %1520 = vmatprep.subr.mxu0 0.0
    %1521 = vmatpush2.msra.mxu0 0.0
    %1522 = vmatprep.subr.mxu0 0.0
    %1523 = vmatpush2.msra.mxu0 0.0
    %1524 = vmatprep.subr.mxu0 0.0
    %1525 = vmatpush2.msra.mxu0 0.0
    %1526 = vmatprep.subr.mxu0 0.0
    %1527 = vmatpush2.msra.mxu0 0.0
    %1528 = vmatprep.subr.mxu0 0.0
    %1529 = vmatpush2.msra.mxu0 0.0
    %1530 = vmatprep.subr.mxu0 0.0
    %1531 = vmatpush2.msra.mxu0 0.0
    %1532 = vmatprep.subr.mxu0 0.0
    %1533 = vmatpush2.msra.mxu0 0.0
    %1534 = vmatprep.subr.mxu0 0.0
    %1535 = vmatpush2.msra.mxu0 0.0
    %1536 = vmatprep.mubr.f32.mxu0 0.0
    %v1537 = vand.u32 %v1174, 4294901760
    %v1538 = vsub.f32 %v1174, %v1537
    %1539 = vmatmul.mubr.f32.gmra.mxu0 %v1538
    %v1540 = vpop.f32.mrf.mxu0
    %v1541 = vadd.f32 %v1437, %v1540
    %v1542 = vpop.f32.mrf.mxu0
    %1543 = vdwg.mxu0
    %1544 = vmatprep.subr.mxu0 0.0
    %v1545 = vand.u32 %v1190, 4294901760
    %1546 = vmatpush1.msra.mxu0 %v1545
    %1547 = vmatprep.subr.mxu0 0.0
    %v1548 = vand.u32 %v1189, 4294901760
    %1549 = vmatpush1.msra.mxu0 %v1548
    %1550 = vmatprep.subr.mxu0 0.0
    %v1551 = vand.u32 %v1188, 4294901760
    %1552 = vmatpush1.msra.mxu0 %v1551
    %1553 = vmatprep.subr.mxu0 0.0
    %v1554 = vand.u32 %v1187, 4294901760
    %1555 = vmatpush1.msra.mxu0 %v1554
    %1556 = vmatprep.subr.mxu0 0.0
    %v1557 = vand.u32 %v1186, 4294901760
    %1558 = vmatpush1.msra.mxu0 %v1557
    %1559 = vmatprep.subr.mxu0 0.0
    %v1560 = vand.u32 %v1185, 4294901760
    %1561 = vmatpush1.msra.mxu0 %v1560
    %1562 = vmatprep.subr.mxu0 0.0
    %v1563 = vand.u32 %v1184, 4294901760
    %1564 = vmatpush1.msra.mxu0 %v1563
    %1565 = vmatprep.subr.mxu0 0.0
    %v1566 = vand.u32 %v1183, 4294901760
    %1567 = vmatpush1.msra.mxu0 %v1566
    %1568 = vmatprep.subr.mxu0 0.0
    %v1569 = vand.u32 %v1182, 4294901760
    %1570 = vmatpush1.msra.mxu0 %v1569
    %1571 = vmatprep.subr.mxu0 0.0
    %v1572 = vand.u32 %v1181, 4294901760
    %1573 = vmatpush1.msra.mxu0 %v1572
    %1574 = vmatprep.subr.mxu0 0.0
    %v1575 = vand.u32 %v1180, 4294901760
    %1576 = vmatpush1.msra.mxu0 %v1575
    %1577 = vmatprep.subr.mxu0 0.0
    %v1578 = vand.u32 %v1179, 4294901760
    %1579 = vmatpush1.msra.mxu0 %v1578
    %1580 = vmatprep.subr.mxu0 0.0
    %v1581 = vand.u32 %v1178, 4294901760
    %1582 = vmatpush1.msra.mxu0 %v1581
    %1583 = vmatprep.subr.mxu0 0.0
    %v1584 = vand.u32 %v1177, 4294901760
    %1585 = vmatpush1.msra.mxu0 %v1584
    %1586 = vmatprep.subr.mxu0 0.0
    %v1587 = vand.u32 %v1176, 4294901760
    %1588 = vmatpush1.msra.mxu0 %v1587
    %1589 = vmatprep.subr.mxu0 0.0
    %v1590 = vand.u32 %v1175, 4294901760
    %1591 = vmatpush1.msra.mxu0 %v1590
    %1592 = vmatprep.subr.mxu0 0.0
    %1593 = vmatpush2.msra.mxu0 0.0
    %1594 = vmatprep.subr.mxu0 0.0
    %1595 = vmatpush2.msra.mxu0 0.0
    %1596 = vmatprep.subr.mxu0 0.0
    %1597 = vmatpush2.msra.mxu0 0.0
    %1598 = vmatprep.subr.mxu0 0.0
    %1599 = vmatpush2.msra.mxu0 0.0
    %1600 = vmatprep.subr.mxu0 0.0
    %1601 = vmatpush2.msra.mxu0 0.0
    %1602 = vmatprep.subr.mxu0 0.0
    %1603 = vmatpush2.msra.mxu0 0.0
    %1604 = vmatprep.subr.mxu0 0.0
    %1605 = vmatpush2.msra.mxu0 0.0
    %1606 = vmatprep.subr.mxu0 0.0
    %1607 = vmatpush2.msra.mxu0 0.0
    %1608 = vmatprep.subr.mxu0 0.0
    %1609 = vmatpush2.msra.mxu0 0.0
    %1610 = vmatprep.subr.mxu0 0.0
    %1611 = vmatpush2.msra.mxu0 0.0
    %1612 = vmatprep.subr.mxu0 0.0
    %1613 = vmatpush2.msra.mxu0 0.0
    %1614 = vmatprep.subr.mxu0 0.0
    %1615 = vmatpush2.msra.mxu0 0.0
    %1616 = vmatprep.subr.mxu0 0.0
    %1617 = vmatpush2.msra.mxu0 0.0
    %1618 = vmatprep.subr.mxu0 0.0
    %1619 = vmatpush2.msra.mxu0 0.0
    %1620 = vmatprep.subr.mxu0 0.0
    %1621 = vmatpush2.msra.mxu0 0.0
    %1622 = vmatprep.subr.mxu0 0.0
    %1623 = vmatpush2.msra.mxu0 0.0
    %1624 = vmatprep.mubr.f32.mxu0 0.0
    %v1625 = vand.u32 %v1174, 4294901760
    %v1626 = vsub.f32 %v1174, %v1625
    %v1627 = vand.u32 %v1626, 4294901760
    %1628 = vmatmul.mubr.f32.gmra.mxu0 %v1627
    %v1629 = vpop.f32.mrf.mxu0
    %v1630 = vadd.f32 %v1541, %v1629
    %v1631 = vpop.f32.mrf.mxu0
    %1632 = vdwg.mxu0
    %1633 = vmatprep.subr.mxu0 0.0
    %v1634 = vand.u32 %v1190, 4294901760
    %v1635 = vsub.f32 %v1190, %v1634
    %v1636 = vand.u32 %v1635, 4294901760
    %1637 = vmatpush1.msra.mxu0 %v1636
    %1638 = vmatprep.subr.mxu0 0.0
    %v1639 = vand.u32 %v1189, 4294901760
    %v1640 = vsub.f32 %v1189, %v1639
    %v1641 = vand.u32 %v1640, 4294901760
    %1642 = vmatpush1.msra.mxu0 %v1641
    %1643 = vmatprep.subr.mxu0 0.0
    %v1644 = vand.u32 %v1188, 4294901760
    %v1645 = vsub.f32 %v1188, %v1644
    %v1646 = vand.u32 %v1645, 4294901760
    %1647 = vmatpush1.msra.mxu0 %v1646
    %1648 = vmatprep.subr.mxu0 0.0
    %v1649 = vand.u32 %v1187, 4294901760
    %v1650 = vsub.f32 %v1187, %v1649
    %v1651 = vand.u32 %v1650, 4294901760
    %1652 = vmatpush1.msra.mxu0 %v1651
    %1653 = vmatprep.subr.mxu0 0.0
    %v1654 = vand.u32 %v1186, 4294901760
    %v1655 = vsub.f32 %v1186, %v1654
    %v1656 = vand.u32 %v1655, 4294901760
    %1657 = vmatpush1.msra.mxu0 %v1656
    %1658 = vmatprep.subr.mxu0 0.0
    %v1659 = vand.u32 %v1185, 4294901760
    %v1660 = vsub.f32 %v1185, %v1659
    %v1661 = vand.u32 %v1660, 4294901760
    %1662 = vmatpush1.msra.mxu0 %v1661
    %1663 = vmatprep.subr.mxu0 0.0
    %v1664 = vand.u32 %v1184, 4294901760
    %v1665 = vsub.f32 %v1184, %v1664
    %v1666 = vand.u32 %v1665, 4294901760
    %1667 = vmatpush1.msra.mxu0 %v1666
    %1668 = vmatprep.subr.mxu0 0.0
    %v1669 = vand.u32 %v1183, 4294901760
    %v1670 = vsub.f32 %v1183, %v1669
    %v1671 = vand.u32 %v1670, 4294901760
    %1672 = vmatpush1.msra.mxu0 %v1671
    %1673 = vmatprep.subr.mxu0 0.0
    %v1674 = vand.u32 %v1182, 4294901760
    %v1675 = vsub.f32 %v1182, %v1674
    %v1676 = vand.u32 %v1675, 4294901760
    %1677 = vmatpush1.msra.mxu0 %v1676
    %1678 = vmatprep.subr.mxu0 0.0
    %v1679 = vand.u32 %v1181, 4294901760
    %v1680 = vsub.f32 %v1181, %v1679
    %v1681 = vand.u32 %v1680, 4294901760
    %1682 = vmatpush1.msra.mxu0 %v1681
    %1683 = vmatprep.subr.mxu0 0.0
    %v1684 = vand.u32 %v1180, 4294901760
    %v1685 = vsub.f32 %v1180, %v1684
    %v1686 = vand.u32 %v1685, 4294901760
    %1687 = vmatpush1.msra.mxu0 %v1686
    %1688 = vmatprep.subr.mxu0 0.0
    %v1689 = vand.u32 %v1179, 4294901760
    %v1690 = vsub.f32 %v1179, %v1689
    %v1691 = vand.u32 %v1690, 4294901760
    %1692 = vmatpush1.msra.mxu0 %v1691
    %1693 = vmatprep.subr.mxu0 0.0
    %v1694 = vand.u32 %v1178, 4294901760
    %v1695 = vsub.f32 %v1178, %v1694
    %v1696 = vand.u32 %v1695, 4294901760
    %1697 = vmatpush1.msra.mxu0 %v1696
    %1698 = vmatprep.subr.mxu0 0.0
    %v1699 = vand.u32 %v1177, 4294901760
    %v1700 = vsub.f32 %v1177, %v1699
    %v1701 = vand.u32 %v1700, 4294901760
    %1702 = vmatpush1.msra.mxu0 %v1701
    %1703 = vmatprep.subr.mxu0 0.0
    %v1704 = vand.u32 %v1176, 4294901760
    %v1705 = vsub.f32 %v1176, %v1704
    %v1706 = vand.u32 %v1705, 4294901760
    %1707 = vmatpush1.msra.mxu0 %v1706
    %1708 = vmatprep.subr.mxu0 0.0
    %v1709 = vand.u32 %v1175, 4294901760
    %v1710 = vsub.f32 %v1175, %v1709
    %v1711 = vand.u32 %v1710, 4294901760
    %1712 = vmatpush1.msra.mxu0 %v1711
    %1713 = vmatprep.subr.mxu0 0.0
    %1714 = vmatpush2.msra.mxu0 0.0
    %1715 = vmatprep.subr.mxu0 0.0
    %1716 = vmatpush2.msra.mxu0 0.0
    %1717 = vmatprep.subr.mxu0 0.0
    %1718 = vmatpush2.msra.mxu0 0.0
    %1719 = vmatprep.subr.mxu0 0.0
    %1720 = vmatpush2.msra.mxu0 0.0
    %1721 = vmatprep.subr.mxu0 0.0
    %1722 = vmatpush2.msra.mxu0 0.0
    %1723 = vmatprep.subr.mxu0 0.0
    %1724 = vmatpush2.msra.mxu0 0.0
    %1725 = vmatprep.subr.mxu0 0.0
    %1726 = vmatpush2.msra.mxu0 0.0
    %1727 = vmatprep.subr.mxu0 0.0
    %1728 = vmatpush2.msra.mxu0 0.0
    %1729 = vmatprep.subr.mxu0 0.0
    %1730 = vmatpush2.msra.mxu0 0.0
    %1731 = vmatprep.subr.mxu0 0.0
    %1732 = vmatpush2.msra.mxu0 0.0
    %1733 = vmatprep.subr.mxu0 0.0
    %1734 = vmatpush2.msra.mxu0 0.0
    %1735 = vmatprep.subr.mxu0 0.0
    %1736 = vmatpush2.msra.mxu0 0.0
    %1737 = vmatprep.subr.mxu0 0.0
    %1738 = vmatpush2.msra.mxu0 0.0
    %1739 = vmatprep.subr.mxu0 0.0
    %1740 = vmatpush2.msra.mxu0 0.0
    %1741 = vmatprep.subr.mxu0 0.0
    %1742 = vmatpush2.msra.mxu0 0.0
    %1743 = vmatprep.subr.mxu0 0.0
    %1744 = vmatpush2.msra.mxu0 0.0
    %1745 = vmatprep.mubr.f32.mxu0 0.0
    %v1746 = vand.u32 %v1174, 4294901760
    %1747 = vmatmul.mubr.f32.gmra.mxu0 %v1746
    %v1748 = vpop.f32.mrf.mxu0
    %v1749 = vadd.f32 %v1630, %v1748
    %v1750 = vpop.f32.mrf.mxu0
    %1751 = vdwg.mxu0
    %1752 = vmatprep.subr.mxu0 0.0
    %v1753 = vand.u32 %v1190, 4294901760
    %1754 = vmatpush1.msra.mxu0 %v1753
    %1755 = vmatprep.subr.mxu0 0.0
    %v1756 = vand.u32 %v1189, 4294901760
    %1757 = vmatpush1.msra.mxu0 %v1756
    %1758 = vmatprep.subr.mxu0 0.0
    %v1759 = vand.u32 %v1188, 4294901760
    %1760 = vmatpush1.msra.mxu0 %v1759
    %1761 = vmatprep.subr.mxu0 0.0
    %v1762 = vand.u32 %v1187, 4294901760
    %1763 = vmatpush1.msra.mxu0 %v1762
    %1764 = vmatprep.subr.mxu0 0.0
    %v1765 = vand.u32 %v1186, 4294901760
    %1766 = vmatpush1.msra.mxu0 %v1765
    %1767 = vmatprep.subr.mxu0 0.0
    %v1768 = vand.u32 %v1185, 4294901760
    %1769 = vmatpush1.msra.mxu0 %v1768
    %1770 = vmatprep.subr.mxu0 0.0
    %v1771 = vand.u32 %v1184, 4294901760
    %1772 = vmatpush1.msra.mxu0 %v1771
    %1773 = vmatprep.subr.mxu0 0.0
    %v1774 = vand.u32 %v1183, 4294901760
    %1775 = vmatpush1.msra.mxu0 %v1774
    %1776 = vmatprep.subr.mxu0 0.0
    %v1777 = vand.u32 %v1182, 4294901760
    %1778 = vmatpush1.msra.mxu0 %v1777
    %1779 = vmatprep.subr.mxu0 0.0
    %v1780 = vand.u32 %v1181, 4294901760
    %1781 = vmatpush1.msra.mxu0 %v1780
    %1782 = vmatprep.subr.mxu0 0.0
    %v1783 = vand.u32 %v1180, 4294901760
    %1784 = vmatpush1.msra.mxu0 %v1783
    %1785 = vmatprep.subr.mxu0 0.0
    %v1786 = vand.u32 %v1179, 4294901760
    %1787 = vmatpush1.msra.mxu0 %v1786
    %1788 = vmatprep.subr.mxu0 0.0
    %v1789 = vand.u32 %v1178, 4294901760
    %1790 = vmatpush1.msra.mxu0 %v1789
    %1791 = vmatprep.subr.mxu0 0.0
    %v1792 = vand.u32 %v1177, 4294901760
    %1793 = vmatpush1.msra.mxu0 %v1792
    %1794 = vmatprep.subr.mxu0 0.0
    %v1795 = vand.u32 %v1176, 4294901760
    %1796 = vmatpush1.msra.mxu0 %v1795
    %1797 = vmatprep.subr.mxu0 0.0
    %v1798 = vand.u32 %v1175, 4294901760
    %1799 = vmatpush1.msra.mxu0 %v1798
    %1800 = vmatprep.subr.mxu0 0.0
    %1801 = vmatpush2.msra.mxu0 0.0
    %1802 = vmatprep.subr.mxu0 0.0
    %1803 = vmatpush2.msra.mxu0 0.0
    %1804 = vmatprep.subr.mxu0 0.0
    %1805 = vmatpush2.msra.mxu0 0.0
    %1806 = vmatprep.subr.mxu0 0.0
    %1807 = vmatpush2.msra.mxu0 0.0
    %1808 = vmatprep.subr.mxu0 0.0
    %1809 = vmatpush2.msra.mxu0 0.0
    %1810 = vmatprep.subr.mxu0 0.0
    %1811 = vmatpush2.msra.mxu0 0.0
    %1812 = vmatprep.subr.mxu0 0.0
    %1813 = vmatpush2.msra.mxu0 0.0
    %1814 = vmatprep.subr.mxu0 0.0
    %1815 = vmatpush2.msra.mxu0 0.0
    %1816 = vmatprep.subr.mxu0 0.0
    %1817 = vmatpush2.msra.mxu0 0.0
    %1818 = vmatprep.subr.mxu0 0.0
    %1819 = vmatpush2.msra.mxu0 0.0
    %1820 = vmatprep.subr.mxu0 0.0
    %1821 = vmatpush2.msra.mxu0 0.0
    %1822 = vmatprep.subr.mxu0 0.0
    %1823 = vmatpush2.msra.mxu0 0.0
    %1824 = vmatprep.subr.mxu0 0.0
    %1825 = vmatpush2.msra.mxu0 0.0
    %1826 = vmatprep.subr.mxu0 0.0
    %1827 = vmatpush2.msra.mxu0 0.0
    %1828 = vmatprep.subr.mxu0 0.0
    %1829 = vmatpush2.msra.mxu0 0.0
    %1830 = vmatprep.subr.mxu0 0.0
    %1831 = vmatpush2.msra.mxu0 0.0
    %1832 = vmatprep.mubr.f32.mxu0 0.0
    %v1833 = vand.u32 %v1174, 4294901760
    %1834 = vmatmul.mubr.f32.gmra.mxu0 %v1833
    %v1835 = vpop.f32.mrf.mxu0
    %v1836 = vadd.f32 %v1749, %v1835
    %v1837 = vpop.f32.mrf.mxu0
    %1838 = vdwg.mxu0
    %v1839 = vtanh.pop %v1836
    %v1840 = vld [vmem:[%s7] sm:$0xff]
    %v1841 = vld [vmem:[%s7 + $0x8] sm:$0xff]
    %v1842 = vld [vmem:[%s7 + $0x10] sm:$0xff]
    %v1843 = vld [vmem:[%s7 + $0x18] sm:$0xff]
    %v1844 = vld [vmem:[%s7 + $0x20] sm:$0xff]
    %v1845 = vld [vmem:[%s7 + $0x28] sm:$0xff]
    %v1846 = vld [vmem:[%s7 + $0x30] sm:$0xff]
    %v1847 = vld [vmem:[%s7 + $0x38] sm:$0xff]
    %v1848 = vld [vmem:[%s7 + $0x40] sm:$0xff]
    %v1849 = vld [vmem:[%s7 + $0x48] sm:$0xff]
    %v1850 = vld [vmem:[%s7 + $0x50] sm:$0xff]
    %v1851 = vld [vmem:[%s7 + $0x58] sm:$0xff]
    %v1852 = vld [vmem:[%s7 + $0x60] sm:$0xff]
    %v1853 = vld [vmem:[%s7 + $0x68] sm:$0xff]
    %v1854 = vld [vmem:[%s7 + $0x70] sm:$0xff]
    %v1855 = vld [vmem:[%s7 + $0x78] sm:$0xff]
    %v1856 = vld [vmem:[%s8] sm:$0x1]
    %v1858 = vlaneseq
    %v1859 = vshrl.u32 %v1858, 7
    %v1860 = vsub.s32 0, %v1859
    %v1861 = vrot.slane %v1856, %v1860
    %1863 = vmatprep.subr.mxu0 0.0
    %v1864 = vand.u32 %v1855, 4294901760
    %1865 = vmatpush1.msra.mxu0 %v1864
    %1866 = vmatprep.subr.mxu0 0.0
    %v1867 = vand.u32 %v1854, 4294901760
    %1868 = vmatpush1.msra.mxu0 %v1867
    %1869 = vmatprep.subr.mxu0 0.0
    %v1870 = vand.u32 %v1853, 4294901760
    %1871 = vmatpush1.msra.mxu0 %v1870
    %1872 = vmatprep.subr.mxu0 0.0
    %v1873 = vand.u32 %v1852, 4294901760
    %1874 = vmatpush1.msra.mxu0 %v1873
    %1875 = vmatprep.subr.mxu0 0.0
    %v1876 = vand.u32 %v1851, 4294901760
    %1877 = vmatpush1.msra.mxu0 %v1876
    %1878 = vmatprep.subr.mxu0 0.0
    %v1879 = vand.u32 %v1850, 4294901760
    %1880 = vmatpush1.msra.mxu0 %v1879
    %1881 = vmatprep.subr.mxu0 0.0
    %v1882 = vand.u32 %v1849, 4294901760
    %1883 = vmatpush1.msra.mxu0 %v1882
    %1884 = vmatprep.subr.mxu0 0.0
    %v1885 = vand.u32 %v1848, 4294901760
    %1886 = vmatpush1.msra.mxu0 %v1885
    %1887 = vmatprep.subr.mxu0 0.0
    %v1888 = vand.u32 %v1847, 4294901760
    %1889 = vmatpush1.msra.mxu0 %v1888
    %1890 = vmatprep.subr.mxu0 0.0
    %v1891 = vand.u32 %v1846, 4294901760
    %1892 = vmatpush1.msra.mxu0 %v1891
    %1893 = vmatprep.subr.mxu0 0.0
    %v1894 = vand.u32 %v1845, 4294901760
    %1895 = vmatpush1.msra.mxu0 %v1894
    %1896 = vmatprep.subr.mxu0 0.0
    %v1897 = vand.u32 %v1844, 4294901760
    %1898 = vmatpush1.msra.mxu0 %v1897
    %1899 = vmatprep.subr.mxu0 0.0
    %v1900 = vand.u32 %v1843, 4294901760
    %1901 = vmatpush1.msra.mxu0 %v1900
    %1902 = vmatprep.subr.mxu0 0.0
    %v1903 = vand.u32 %v1842, 4294901760
    %1904 = vmatpush1.msra.mxu0 %v1903
    %1905 = vmatprep.subr.mxu0 0.0
    %v1906 = vand.u32 %v1841, 4294901760
    %1907 = vmatpush1.msra.mxu0 %v1906
    %1908 = vmatprep.subr.mxu0 0.0
    %v1909 = vand.u32 %v1840, 4294901760
    %1910 = vmatpush1.msra.mxu0 %v1909
    %1911 = vmatprep.subr.mxu0 0.0
    %1912 = vmatpush2.msra.mxu0 0.0
    %1913 = vmatprep.subr.mxu0 0.0
    %1914 = vmatpush2.msra.mxu0 0.0
    %1915 = vmatprep.subr.mxu0 0.0
    %1916 = vmatpush2.msra.mxu0 0.0
    %1917 = vmatprep.subr.mxu0 0.0
    %1918 = vmatpush2.msra.mxu0 0.0
    %1919 = vmatprep.subr.mxu0 0.0
    %1920 = vmatpush2.msra.mxu0 0.0
    %1921 = vmatprep.subr.mxu0 0.0
    %1922 = vmatpush2.msra.mxu0 0.0
    %1923 = vmatprep.subr.mxu0 0.0
    %1924 = vmatpush2.msra.mxu0 0.0
    %1925 = vmatprep.subr.mxu0 0.0
    %1926 = vmatpush2.msra.mxu0 0.0
    %1927 = vmatprep.subr.mxu0 0.0
    %1928 = vmatpush2.msra.mxu0 0.0
    %1929 = vmatprep.subr.mxu0 0.0
    %1930 = vmatpush2.msra.mxu0 0.0
    %1931 = vmatprep.subr.mxu0 0.0
    %1932 = vmatpush2.msra.mxu0 0.0
    %1933 = vmatprep.subr.mxu0 0.0
    %1934 = vmatpush2.msra.mxu0 0.0
    %1935 = vmatprep.subr.mxu0 0.0
    %1936 = vmatpush2.msra.mxu0 0.0
    %1937 = vmatprep.subr.mxu0 0.0
    %1938 = vmatpush2.msra.mxu0 0.0
    %1939 = vmatprep.subr.mxu0 0.0
    %1940 = vmatpush2.msra.mxu0 0.0
    %1941 = vmatprep.subr.mxu0 0.0
    %1942 = vmatpush2.msra.mxu0 0.0
    %1943 = vmatprep.mubr.f32.mxu0 0.0
    %v1944 = vand.u32 %v1839, 4294901760
    %v1945 = vsub.f32 %v1839, %v1944
    %v1946 = vand.u32 %v1945, 4294901760
    %v1947 = vsub.f32 %v1945, %v1946
    %v1948 = vand.u32 %v1947, 4294901760
    %1949 = vmatmul.mubr.f32.gmra.mxu0 %v1948
    %v1950 = vpop.f32.mrf.mxu0
    %v1951 = vadd.f32 %v1861, %v1950
    %v1952 = vpop.f32.mrf.mxu0
    %1953 = vdwg.mxu0
    %1954 = vmatprep.subr.mxu0 0.0
    %v1955 = vand.u32 %v1855, 4294901760
    %v1956 = vsub.f32 %v1855, %v1955
    %v1957 = vand.u32 %v1956, 4294901760
    %v1958 = vsub.f32 %v1956, %v1957
    %v1959 = vand.u32 %v1958, 4294901760
    %1960 = vmatpush1.msra.mxu0 %v1959
    %1961 = vmatprep.subr.mxu0 0.0
    %v1962 = vand.u32 %v1854, 4294901760
    %v1963 = vsub.f32 %v1854, %v1962
    %v1964 = vand.u32 %v1963, 4294901760
    %v1965 = vsub.f32 %v1963, %v1964
    %v1966 = vand.u32 %v1965, 4294901760
    %1967 = vmatpush1.msra.mxu0 %v1966
    %1968 = vmatprep.subr.mxu0 0.0
    %v1969 = vand.u32 %v1853, 4294901760
    %v1970 = vsub.f32 %v1853, %v1969
    %v1971 = vand.u32 %v1970, 4294901760
    %v1972 = vsub.f32 %v1970, %v1971
    %v1973 = vand.u32 %v1972, 4294901760
    %1974 = vmatpush1.msra.mxu0 %v1973
    %1975 = vmatprep.subr.mxu0 0.0
    %v1976 = vand.u32 %v1852, 4294901760
    %v1977 = vsub.f32 %v1852, %v1976
    %v1978 = vand.u32 %v1977, 4294901760
    %v1979 = vsub.f32 %v1977, %v1978
    %v1980 = vand.u32 %v1979, 4294901760
    %1981 = vmatpush1.msra.mxu0 %v1980
    %1982 = vmatprep.subr.mxu0 0.0
    %v1983 = vand.u32 %v1851, 4294901760
    %v1984 = vsub.f32 %v1851, %v1983
    %v1985 = vand.u32 %v1984, 4294901760
    %v1986 = vsub.f32 %v1984, %v1985
    %v1987 = vand.u32 %v1986, 4294901760
    %1988 = vmatpush1.msra.mxu0 %v1987
    %1989 = vmatprep.subr.mxu0 0.0
    %v1990 = vand.u32 %v1850, 4294901760
    %v1991 = vsub.f32 %v1850, %v1990
    %v1992 = vand.u32 %v1991, 4294901760
    %v1993 = vsub.f32 %v1991, %v1992
    %v1994 = vand.u32 %v1993, 4294901760
    %1995 = vmatpush1.msra.mxu0 %v1994
    %1996 = vmatprep.subr.mxu0 0.0
    %v1997 = vand.u32 %v1849, 4294901760
    %v1998 = vsub.f32 %v1849, %v1997
    %v1999 = vand.u32 %v1998, 4294901760
    %v2000 = vsub.f32 %v1998, %v1999
    %v2001 = vand.u32 %v2000, 4294901760
    %2002 = vmatpush1.msra.mxu0 %v2001
    %2003 = vmatprep.subr.mxu0 0.0
    %v2004 = vand.u32 %v1848, 4294901760
    %v2005 = vsub.f32 %v1848, %v2004
    %v2006 = vand.u32 %v2005, 4294901760
    %v2007 = vsub.f32 %v2005, %v2006
    %v2008 = vand.u32 %v2007, 4294901760
    %2009 = vmatpush1.msra.mxu0 %v2008
    %2010 = vmatprep.subr.mxu0 0.0
    %v2011 = vand.u32 %v1847, 4294901760
    %v2012 = vsub.f32 %v1847, %v2011
    %v2013 = vand.u32 %v2012, 4294901760
    %v2014 = vsub.f32 %v2012, %v2013
    %v2015 = vand.u32 %v2014, 4294901760
    %2016 = vmatpush1.msra.mxu0 %v2015
    %2017 = vmatprep.subr.mxu0 0.0
    %v2018 = vand.u32 %v1846, 4294901760
    %v2019 = vsub.f32 %v1846, %v2018
    %v2020 = vand.u32 %v2019, 4294901760
    %v2021 = vsub.f32 %v2019, %v2020
    %v2022 = vand.u32 %v2021, 4294901760
    %2023 = vmatpush1.msra.mxu0 %v2022
    %2024 = vmatprep.subr.mxu0 0.0
    %v2025 = vand.u32 %v1845, 4294901760
    %v2026 = vsub.f32 %v1845, %v2025
    %v2027 = vand.u32 %v2026, 4294901760
    %v2028 = vsub.f32 %v2026, %v2027
    %v2029 = vand.u32 %v2028, 4294901760
    %2030 = vmatpush1.msra.mxu0 %v2029
    %2031 = vmatprep.subr.mxu0 0.0
    %v2032 = vand.u32 %v1844, 4294901760
    %v2033 = vsub.f32 %v1844, %v2032
    %v2034 = vand.u32 %v2033, 4294901760
    %v2035 = vsub.f32 %v2033, %v2034
    %v2036 = vand.u32 %v2035, 4294901760
    %2037 = vmatpush1.msra.mxu0 %v2036
    %2038 = vmatprep.subr.mxu0 0.0
    %v2039 = vand.u32 %v1843, 4294901760
    %v2040 = vsub.f32 %v1843, %v2039
    %v2041 = vand.u32 %v2040, 4294901760
    %v2042 = vsub.f32 %v2040, %v2041
    %v2043 = vand.u32 %v2042, 4294901760
    %2044 = vmatpush1.msra.mxu0 %v2043
    %2045 = vmatprep.subr.mxu0 0.0
    %v2046 = vand.u32 %v1842, 4294901760
    %v2047 = vsub.f32 %v1842, %v2046
    %v2048 = vand.u32 %v2047, 4294901760
    %v2049 = vsub.f32 %v2047, %v2048
    %v2050 = vand.u32 %v2049, 4294901760
    %2051 = vmatpush1.msra.mxu0 %v2050
    %2052 = vmatprep.subr.mxu0 0.0
    %v2053 = vand.u32 %v1841, 4294901760
    %v2054 = vsub.f32 %v1841, %v2053
    %v2055 = vand.u32 %v2054, 4294901760
    %v2056 = vsub.f32 %v2054, %v2055
    %v2057 = vand.u32 %v2056, 4294901760
    %2058 = vmatpush1.msra.mxu0 %v2057
    %2059 = vmatprep.subr.mxu0 0.0
    %v2060 = vand.u32 %v1840, 4294901760
    %v2061 = vsub.f32 %v1840, %v2060
    %v2062 = vand.u32 %v2061, 4294901760
    %v2063 = vsub.f32 %v2061, %v2062
    %v2064 = vand.u32 %v2063, 4294901760
    %2065 = vmatpush1.msra.mxu0 %v2064
    %2066 = vmatprep.subr.mxu0 0.0
    %2067 = vmatpush2.msra.mxu0 0.0
    %2068 = vmatprep.subr.mxu0 0.0
    %2069 = vmatpush2.msra.mxu0 0.0
    %2070 = vmatprep.subr.mxu0 0.0
    %2071 = vmatpush2.msra.mxu0 0.0
    %2072 = vmatprep.subr.mxu0 0.0
    %2073 = vmatpush2.msra.mxu0 0.0
    %2074 = vmatprep.subr.mxu0 0.0
    %2075 = vmatpush2.msra.mxu0 0.0
    %2076 = vmatprep.subr.mxu0 0.0
    %2077 = vmatpush2.msra.mxu0 0.0
    %2078 = vmatprep.subr.mxu0 0.0
    %2079 = vmatpush2.msra.mxu0 0.0
    %2080 = vmatprep.subr.mxu0 0.0
    %2081 = vmatpush2.msra.mxu0 0.0
    %2082 = vmatprep.subr.mxu0 0.0
    %2083 = vmatpush2.msra.mxu0 0.0
    %2084 = vmatprep.subr.mxu0 0.0
    %2085 = vmatpush2.msra.mxu0 0.0
    %2086 = vmatprep.subr.mxu0 0.0
    %2087 = vmatpush2.msra.mxu0 0.0
    %2088 = vmatprep.subr.mxu0 0.0
    %2089 = vmatpush2.msra.mxu0 0.0
    %2090 = vmatprep.subr.mxu0 0.0
    %2091 = vmatpush2.msra.mxu0 0.0
    %2092 = vmatprep.subr.mxu0 0.0
    %2093 = vmatpush2.msra.mxu0 0.0
    %2094 = vmatprep.subr.mxu0 0.0
    %2095 = vmatpush2.msra.mxu0 0.0
    %2096 = vmatprep.subr.mxu0 0.0
    %2097 = vmatpush2.msra.mxu0 0.0
    %2098 = vmatprep.mubr.f32.mxu0 0.0
    %v2099 = vand.u32 %v1839, 4294901760
    %2100 = vmatmul.mubr.f32.gmra.mxu0 %v2099
    %v2101 = vpop.f32.mrf.mxu0
    %v2102 = vadd.f32 %v1951, %v2101
    %v2103 = vpop.f32.mrf.mxu0
    %2104 = vdwg.mxu0
    %2105 = vmatprep.subr.mxu0 0.0
    %v2106 = vand.u32 %v1855, 4294901760
    %v2107 = vsub.f32 %v1855, %v2106
    %2108 = vmatpush1.msra.mxu0 %v2107
    %2109 = vmatprep.subr.mxu0 0.0
    %v2110 = vand.u32 %v1854, 4294901760
    %v2111 = vsub.f32 %v1854, %v2110
    %2112 = vmatpush1.msra.mxu0 %v2111
    %2113 = vmatprep.subr.mxu0 0.0
    %v2114 = vand.u32 %v1853, 4294901760
    %v2115 = vsub.f32 %v1853, %v2114
    %2116 = vmatpush1.msra.mxu0 %v2115
    %2117 = vmatprep.subr.mxu0 0.0
    %v2118 = vand.u32 %v1852, 4294901760
    %v2119 = vsub.f32 %v1852, %v2118
    %2120 = vmatpush1.msra.mxu0 %v2119
    %2121 = vmatprep.subr.mxu0 0.0
    %v2122 = vand.u32 %v1851, 4294901760
    %v2123 = vsub.f32 %v1851, %v2122
    %2124 = vmatpush1.msra.mxu0 %v2123
    %2125 = vmatprep.subr.mxu0 0.0
    %v2126 = vand.u32 %v1850, 4294901760
    %v2127 = vsub.f32 %v1850, %v2126
    %2128 = vmatpush1.msra.mxu0 %v2127
    %2129 = vmatprep.subr.mxu0 0.0
    %v2130 = vand.u32 %v1849, 4294901760
    %v2131 = vsub.f32 %v1849, %v2130
    %2132 = vmatpush1.msra.mxu0 %v2131
    %2133 = vmatprep.subr.mxu0 0.0
    %v2134 = vand.u32 %v1848, 4294901760
    %v2135 = vsub.f32 %v1848, %v2134
    %2136 = vmatpush1.msra.mxu0 %v2135
    %2137 = vmatprep.subr.mxu0 0.0
    %v2138 = vand.u32 %v1847, 4294901760
    %v2139 = vsub.f32 %v1847, %v2138
    %2140 = vmatpush1.msra.mxu0 %v2139
    %2141 = vmatprep.subr.mxu0 0.0
    %v2142 = vand.u32 %v1846, 4294901760
    %v2143 = vsub.f32 %v1846, %v2142
    %2144 = vmatpush1.msra.mxu0 %v2143
    %2145 = vmatprep.subr.mxu0 0.0
    %v2146 = vand.u32 %v1845, 4294901760
    %v2147 = vsub.f32 %v1845, %v2146
    %2148 = vmatpush1.msra.mxu0 %v2147
    %2149 = vmatprep.subr.mxu0 0.0
    %v2150 = vand.u32 %v1844, 4294901760
    %v2151 = vsub.f32 %v1844, %v2150
    %2152 = vmatpush1.msra.mxu0 %v2151
    %2153 = vmatprep.subr.mxu0 0.0
    %v2154 = vand.u32 %v1843, 4294901760
    %v2155 = vsub.f32 %v1843, %v2154
    %2156 = vmatpush1.msra.mxu0 %v2155
    %2157 = vmatprep.subr.mxu0 0.0
    %v2158 = vand.u32 %v1842, 4294901760
    %v2159 = vsub.f32 %v1842, %v2158
    %2160 = vmatpush1.msra.mxu0 %v2159
    %2161 = vmatprep.subr.mxu0 0.0
    %v2162 = vand.u32 %v1841, 4294901760
    %v2163 = vsub.f32 %v1841, %v2162
    %2164 = vmatpush1.msra.mxu0 %v2163
    %2165 = vmatprep.subr.mxu0 0.0
    %v2166 = vand.u32 %v1840, 4294901760
    %v2167 = vsub.f32 %v1840, %v2166
    %2168 = vmatpush1.msra.mxu0 %v2167
    %2169 = vmatprep.subr.mxu0 0.0
    %2170 = vmatpush2.msra.mxu0 0.0
    %2171 = vmatprep.subr.mxu0 0.0
    %2172 = vmatpush2.msra.mxu0 0.0
    %2173 = vmatprep.subr.mxu0 0.0
    %2174 = vmatpush2.msra.mxu0 0.0
    %2175 = vmatprep.subr.mxu0 0.0
    %2176 = vmatpush2.msra.mxu0 0.0
    %2177 = vmatprep.subr.mxu0 0.0
    %2178 = vmatpush2.msra.mxu0 0.0
    %2179 = vmatprep.subr.mxu0 0.0
    %2180 = vmatpush2.msra.mxu0 0.0
    %2181 = vmatprep.subr.mxu0 0.0
    %2182 = vmatpush2.msra.mxu0 0.0
    %2183 = vmatprep.subr.mxu0 0.0
    %2184 = vmatpush2.msra.mxu0 0.0
    %2185 = vmatprep.subr.mxu0 0.0
    %2186 = vmatpush2.msra.mxu0 0.0
    %2187 = vmatprep.subr.mxu0 0.0
    %2188 = vmatpush2.msra.mxu0 0.0
    %2189 = vmatprep.subr.mxu0 0.0
    %2190 = vmatpush2.msra.mxu0 0.0
    %2191 = vmatprep.subr.mxu0 0.0
    %2192 = vmatpush2.msra.mxu0 0.0
    %2193 = vmatprep.subr.mxu0 0.0
    %2194 = vmatpush2.msra.mxu0 0.0
    %2195 = vmatprep.subr.mxu0 0.0
    %2196 = vmatpush2.msra.mxu0 0.0
    %2197 = vmatprep.subr.mxu0 0.0
    %2198 = vmatpush2.msra.mxu0 0.0
    %2199 = vmatprep.subr.mxu0 0.0
    %2200 = vmatpush2.msra.mxu0 0.0
    %2201 = vmatprep.mubr.f32.mxu0 0.0
    %v2202 = vand.u32 %v1839, 4294901760
    %v2203 = vsub.f32 %v1839, %v2202
    %2204 = vmatmul.mubr.f32.gmra.mxu0 %v2203
    %v2205 = vpop.f32.mrf.mxu0
    %v2206 = vadd.f32 %v2102, %v2205
    %v2207 = vpop.f32.mrf.mxu0
    %2208 = vdwg.mxu0
    %2209 = vmatprep.subr.mxu0 0.0
    %v2210 = vand.u32 %v1855, 4294901760
    %2211 = vmatpush1.msra.mxu0 %v2210
    %2212 = vmatprep.subr.mxu0 0.0
    %v2213 = vand.u32 %v1854, 4294901760
    %2214 = vmatpush1.msra.mxu0 %v2213
    %2215 = vmatprep.subr.mxu0 0.0
    %v2216 = vand.u32 %v1853, 4294901760
    %2217 = vmatpush1.msra.mxu0 %v2216
    %2218 = vmatprep.subr.mxu0 0.0
    %v2219 = vand.u32 %v1852, 4294901760
    %2220 = vmatpush1.msra.mxu0 %v2219
    %2221 = vmatprep.subr.mxu0 0.0
    %v2222 = vand.u32 %v1851, 4294901760
    %2223 = vmatpush1.msra.mxu0 %v2222
    %2224 = vmatprep.subr.mxu0 0.0
    %v2225 = vand.u32 %v1850, 4294901760
    %2226 = vmatpush1.msra.mxu0 %v2225
    %2227 = vmatprep.subr.mxu0 0.0
    %v2228 = vand.u32 %v1849, 4294901760
    %2229 = vmatpush1.msra.mxu0 %v2228
    %2230 = vmatprep.subr.mxu0 0.0
    %v2231 = vand.u32 %v1848, 4294901760
    %2232 = vmatpush1.msra.mxu0 %v2231
    %2233 = vmatprep.subr.mxu0 0.0
    %v2234 = vand.u32 %v1847, 4294901760
    %2235 = vmatpush1.msra.mxu0 %v2234
    %2236 = vmatprep.subr.mxu0 0.0
    %v2237 = vand.u32 %v1846, 4294901760
    %2238 = vmatpush1.msra.mxu0 %v2237
    %2239 = vmatprep.subr.mxu0 0.0
    %v2240 = vand.u32 %v1845, 4294901760
    %2241 = vmatpush1.msra.mxu0 %v2240
    %2242 = vmatprep.subr.mxu0 0.0
    %v2243 = vand.u32 %v1844, 4294901760
    %2244 = vmatpush1.msra.mxu0 %v2243
    %2245 = vmatprep.subr.mxu0 0.0
    %v2246 = vand.u32 %v1843, 4294901760
    %2247 = vmatpush1.msra.mxu0 %v2246
    %2248 = vmatprep.subr.mxu0 0.0
    %v2249 = vand.u32 %v1842, 4294901760
    %2250 = vmatpush1.msra.mxu0 %v2249
    %2251 = vmatprep.subr.mxu0 0.0
    %v2252 = vand.u32 %v1841, 4294901760
    %2253 = vmatpush1.msra.mxu0 %v2252
    %2254 = vmatprep.subr.mxu0 0.0
    %v2255 = vand.u32 %v1840, 4294901760
    %2256 = vmatpush1.msra.mxu0 %v2255
    %2257 = vmatprep.subr.mxu0 0.0
    %2258 = vmatpush2.msra.mxu0 0.0
    %2259 = vmatprep.subr.mxu0 0.0
    %2260 = vmatpush2.msra.mxu0 0.0
    %2261 = vmatprep.subr.mxu0 0.0
    %2262 = vmatpush2.msra.mxu0 0.0
    %2263 = vmatprep.subr.mxu0 0.0
    %2264 = vmatpush2.msra.mxu0 0.0
    %2265 = vmatprep.subr.mxu0 0.0
    %2266 = vmatpush2.msra.mxu0 0.0
    %2267 = vmatprep.subr.mxu0 0.0
    %2268 = vmatpush2.msra.mxu0 0.0
    %2269 = vmatprep.subr.mxu0 0.0
    %2270 = vmatpush2.msra.mxu0 0.0
    %2271 = vmatprep.subr.mxu0 0.0
    %2272 = vmatpush2.msra.mxu0 0.0
    %2273 = vmatprep.subr.mxu0 0.0
    %2274 = vmatpush2.msra.mxu0 0.0
    %2275 = vmatprep.subr.mxu0 0.0
    %2276 = vmatpush2.msra.mxu0 0.0
    %2277 = vmatprep.subr.mxu0 0.0
    %2278 = vmatpush2.msra.mxu0 0.0
    %2279 = vmatprep.subr.mxu0 0.0
    %2280 = vmatpush2.msra.mxu0 0.0
    %2281 = vmatprep.subr.mxu0 0.0
    %2282 = vmatpush2.msra.mxu0 0.0
    %2283 = vmatprep.subr.mxu0 0.0
    %2284 = vmatpush2.msra.mxu0 0.0
    %2285 = vmatprep.subr.mxu0 0.0
    %2286 = vmatpush2.msra.mxu0 0.0
    %2287 = vmatprep.subr.mxu0 0.0
    %2288 = vmatpush2.msra.mxu0 0.0
    %2289 = vmatprep.mubr.f32.mxu0 0.0
    %v2290 = vand.u32 %v1839, 4294901760
    %v2291 = vsub.f32 %v1839, %v2290
    %v2292 = vand.u32 %v2291, 4294901760
    %2293 = vmatmul.mubr.f32.gmra.mxu0 %v2292
    %v2294 = vpop.f32.mrf.mxu0
    %v2295 = vadd.f32 %v2206, %v2294
    %v2296 = vpop.f32.mrf.mxu0
    %2297 = vdwg.mxu0
    %2298 = vmatprep.subr.mxu0 0.0
    %v2299 = vand.u32 %v1855, 4294901760
    %v2300 = vsub.f32 %v1855, %v2299
    %v2301 = vand.u32 %v2300, 4294901760
    %2302 = vmatpush1.msra.mxu0 %v2301
    %2303 = vmatprep.subr.mxu0 0.0
    %v2304 = vand.u32 %v1854, 4294901760
    %v2305 = vsub.f32 %v1854, %v2304
    %v2306 = vand.u32 %v2305, 4294901760
    %2307 = vmatpush1.msra.mxu0 %v2306
    %2308 = vmatprep.subr.mxu0 0.0
    %v2309 = vand.u32 %v1853, 4294901760
    %v2310 = vsub.f32 %v1853, %v2309
    %v2311 = vand.u32 %v2310, 4294901760
    %2312 = vmatpush1.msra.mxu0 %v2311
    %2313 = vmatprep.subr.mxu0 0.0
    %v2314 = vand.u32 %v1852, 4294901760
    %v2315 = vsub.f32 %v1852, %v2314
    %v2316 = vand.u32 %v2315, 4294901760
    %2317 = vmatpush1.msra.mxu0 %v2316
    %2318 = vmatprep.subr.mxu0 0.0
    %v2319 = vand.u32 %v1851, 4294901760
    %v2320 = vsub.f32 %v1851, %v2319
    %v2321 = vand.u32 %v2320, 4294901760
    %2322 = vmatpush1.msra.mxu0 %v2321
    %2323 = vmatprep.subr.mxu0 0.0
    %v2324 = vand.u32 %v1850, 4294901760
    %v2325 = vsub.f32 %v1850, %v2324
    %v2326 = vand.u32 %v2325, 4294901760
    %2327 = vmatpush1.msra.mxu0 %v2326
    %2328 = vmatprep.subr.mxu0 0.0
    %v2329 = vand.u32 %v1849, 4294901760
    %v2330 = vsub.f32 %v1849, %v2329
    %v2331 = vand.u32 %v2330, 4294901760
    %2332 = vmatpush1.msra.mxu0 %v2331
    %2333 = vmatprep.subr.mxu0 0.0
    %v2334 = vand.u32 %v1848, 4294901760
    %v2335 = vsub.f32 %v1848, %v2334
    %v2336 = vand.u32 %v2335, 4294901760
    %2337 = vmatpush1.msra.mxu0 %v2336
    %2338 = vmatprep.subr.mxu0 0.0
    %v2339 = vand.u32 %v1847, 4294901760
    %v2340 = vsub.f32 %v1847, %v2339
    %v2341 = vand.u32 %v2340, 4294901760
    %2342 = vmatpush1.msra.mxu0 %v2341
    %2343 = vmatprep.subr.mxu0 0.0
    %v2344 = vand.u32 %v1846, 4294901760
    %v2345 = vsub.f32 %v1846, %v2344
    %v2346 = vand.u32 %v2345, 4294901760
    %2347 = vmatpush1.msra.mxu0 %v2346
    %2348 = vmatprep.subr.mxu0 0.0
    %v2349 = vand.u32 %v1845, 4294901760
    %v2350 = vsub.f32 %v1845, %v2349
    %v2351 = vand.u32 %v2350, 4294901760
    %2352 = vmatpush1.msra.mxu0 %v2351
    %2353 = vmatprep.subr.mxu0 0.0
    %v2354 = vand.u32 %v1844, 4294901760
    %v2355 = vsub.f32 %v1844, %v2354
    %v2356 = vand.u32 %v2355, 4294901760
    %2357 = vmatpush1.msra.mxu0 %v2356
    %2358 = vmatprep.subr.mxu0 0.0
    %v2359 = vand.u32 %v1843, 4294901760
    %v2360 = vsub.f32 %v1843, %v2359
    %v2361 = vand.u32 %v2360, 4294901760
    %2362 = vmatpush1.msra.mxu0 %v2361
    %2363 = vmatprep.subr.mxu0 0.0
    %v2364 = vand.u32 %v1842, 4294901760
    %v2365 = vsub.f32 %v1842, %v2364
    %v2366 = vand.u32 %v2365, 4294901760
    %2367 = vmatpush1.msra.mxu0 %v2366
    %2368 = vmatprep.subr.mxu0 0.0
    %v2369 = vand.u32 %v1841, 4294901760
    %v2370 = vsub.f32 %v1841, %v2369
    %v2371 = vand.u32 %v2370, 4294901760
    %2372 = vmatpush1.msra.mxu0 %v2371
    %2373 = vmatprep.subr.mxu0 0.0
    %v2374 = vand.u32 %v1840, 4294901760
    %v2375 = vsub.f32 %v1840, %v2374
    %v2376 = vand.u32 %v2375, 4294901760
    %2377 = vmatpush1.msra.mxu0 %v2376
    %2378 = vmatprep.subr.mxu0 0.0
    %2379 = vmatpush2.msra.mxu0 0.0
    %2380 = vmatprep.subr.mxu0 0.0
    %2381 = vmatpush2.msra.mxu0 0.0
    %2382 = vmatprep.subr.mxu0 0.0
    %2383 = vmatpush2.msra.mxu0 0.0
    %2384 = vmatprep.subr.mxu0 0.0
    %2385 = vmatpush2.msra.mxu0 0.0
    %2386 = vmatprep.subr.mxu0 0.0
    %2387 = vmatpush2.msra.mxu0 0.0
    %2388 = vmatprep.subr.mxu0 0.0
    %2389 = vmatpush2.msra.mxu0 0.0
    %2390 = vmatprep.subr.mxu0 0.0
    %2391 = vmatpush2.msra.mxu0 0.0
    %2392 = vmatprep.subr.mxu0 0.0
    %2393 = vmatpush2.msra.mxu0 0.0
    %2394 = vmatprep.subr.mxu0 0.0
    %2395 = vmatpush2.msra.mxu0 0.0
    %2396 = vmatprep.subr.mxu0 0.0
    %2397 = vmatpush2.msra.mxu0 0.0
    %2398 = vmatprep.subr.mxu0 0.0
    %2399 = vmatpush2.msra.mxu0 0.0
    %2400 = vmatprep.subr.mxu0 0.0
    %2401 = vmatpush2.msra.mxu0 0.0
    %2402 = vmatprep.subr.mxu0 0.0
    %2403 = vmatpush2.msra.mxu0 0.0
    %2404 = vmatprep.subr.mxu0 0.0
    %2405 = vmatpush2.msra.mxu0 0.0
    %2406 = vmatprep.subr.mxu0 0.0
    %2407 = vmatpush2.msra.mxu0 0.0
    %2408 = vmatprep.subr.mxu0 0.0
    %2409 = vmatpush2.msra.mxu0 0.0
    %2410 = vmatprep.mubr.f32.mxu0 0.0
    %v2411 = vand.u32 %v1839, 4294901760
    %2412 = vmatmul.mubr.f32.gmra.mxu0 %v2411
    %v2413 = vpop.f32.mrf.mxu0
    %v2414 = vadd.f32 %v2295, %v2413
    %v2415 = vpop.f32.mrf.mxu0
    %2416 = vdwg.mxu0
    %2417 = vmatprep.subr.mxu0 0.0
    %v2418 = vand.u32 %v1855, 4294901760
    %2419 = vmatpush1.msra.mxu0 %v2418
    %2420 = vmatprep.subr.mxu0 0.0
    %v2421 = vand.u32 %v1854, 4294901760
    %2422 = vmatpush1.msra.mxu0 %v2421
    %2423 = vmatprep.subr.mxu0 0.0
    %v2424 = vand.u32 %v1853, 4294901760
    %2425 = vmatpush1.msra.mxu0 %v2424
    %2426 = vmatprep.subr.mxu0 0.0
    %v2427 = vand.u32 %v1852, 4294901760
    %2428 = vmatpush1.msra.mxu0 %v2427
    %2429 = vmatprep.subr.mxu0 0.0
    %v2430 = vand.u32 %v1851, 4294901760
    %2431 = vmatpush1.msra.mxu0 %v2430
    %2432 = vmatprep.subr.mxu0 0.0
    %v2433 = vand.u32 %v1850, 4294901760
    %2434 = vmatpush1.msra.mxu0 %v2433
    %2435 = vmatprep.subr.mxu0 0.0
    %v2436 = vand.u32 %v1849, 4294901760
    %2437 = vmatpush1.msra.mxu0 %v2436
    %2438 = vmatprep.subr.mxu0 0.0
    %v2439 = vand.u32 %v1848, 4294901760
    %2440 = vmatpush1.msra.mxu0 %v2439
    %2441 = vmatprep.subr.mxu0 0.0
    %v2442 = vand.u32 %v1847, 4294901760
    %2443 = vmatpush1.msra.mxu0 %v2442
    %2444 = vmatprep.subr.mxu0 0.0
    %v2445 = vand.u32 %v1846, 4294901760
    %2446 = vmatpush1.msra.mxu0 %v2445
    %2447 = vmatprep.subr.mxu0 0.0
    %v2448 = vand.u32 %v1845, 4294901760
    %2449 = vmatpush1.msra.mxu0 %v2448
    %2450 = vmatprep.subr.mxu0 0.0
    %v2451 = vand.u32 %v1844, 4294901760
    %2452 = vmatpush1.msra.mxu0 %v2451
    %2453 = vmatprep.subr.mxu0 0.0
    %v2454 = vand.u32 %v1843, 4294901760
    %2455 = vmatpush1.msra.mxu0 %v2454
    %2456 = vmatprep.subr.mxu0 0.0
    %v2457 = vand.u32 %v1842, 4294901760
    %2458 = vmatpush1.msra.mxu0 %v2457
    %2459 = vmatprep.subr.mxu0 0.0
    %v2460 = vand.u32 %v1841, 4294901760
    %2461 = vmatpush1.msra.mxu0 %v2460
    %2462 = vmatprep.subr.mxu0 0.0
    %v2463 = vand.u32 %v1840, 4294901760
    %2464 = vmatpush1.msra.mxu0 %v2463
    %2465 = vmatprep.subr.mxu0 0.0
    %2466 = vmatpush2.msra.mxu0 0.0
    %2467 = vmatprep.subr.mxu0 0.0
    %2468 = vmatpush2.msra.mxu0 0.0
    %2469 = vmatprep.subr.mxu0 0.0
    %2470 = vmatpush2.msra.mxu0 0.0
    %2471 = vmatprep.subr.mxu0 0.0
    %2472 = vmatpush2.msra.mxu0 0.0
    %2473 = vmatprep.subr.mxu0 0.0
    %2474 = vmatpush2.msra.mxu0 0.0
    %2475 = vmatprep.subr.mxu0 0.0
    %2476 = vmatpush2.msra.mxu0 0.0
    %2477 = vmatprep.subr.mxu0 0.0
    %2478 = vmatpush2.msra.mxu0 0.0
    %2479 = vmatprep.subr.mxu0 0.0
    %2480 = vmatpush2.msra.mxu0 0.0
    %2481 = vmatprep.subr.mxu0 0.0
    %2482 = vmatpush2.msra.mxu0 0.0
    %2483 = vmatprep.subr.mxu0 0.0
    %2484 = vmatpush2.msra.mxu0 0.0
    %2485 = vmatprep.subr.mxu0 0.0
    %2486 = vmatpush2.msra.mxu0 0.0
    %2487 = vmatprep.subr.mxu0 0.0
    %2488 = vmatpush2.msra.mxu0 0.0
    %2489 = vmatprep.subr.mxu0 0.0
    %2490 = vmatpush2.msra.mxu0 0.0
    %2491 = vmatprep.subr.mxu0 0.0
    %2492 = vmatpush2.msra.mxu0 0.0
    %2493 = vmatprep.subr.mxu0 0.0
    %2494 = vmatpush2.msra.mxu0 0.0
    %2495 = vmatprep.subr.mxu0 0.0
    %2496 = vmatpush2.msra.mxu0 0.0
    %2497 = vmatprep.mubr.f32.mxu0 0.0
    %v2498 = vand.u32 %v1839, 4294901760
    %2499 = vmatmul.mubr.f32.gmra.mxu0 %v2498
    %v2500 = vpop.f32.mrf.mxu0
    %v2501 = vadd.f32 %v2414, %v2500
    %v2502 = vpop.f32.mrf.mxu0
    %2503 = vdwg.mxu0
    %vm2504 = vcmask 15360
    %2505 = vst.msk [vmem:[%s9] sm:$0xff] %vm2504, %v2501
    // Predicated region
    $region42: #{tpu_custom_call.1} parent=1 // pred_check
      _
    $region43: #{tpu_custom_call.1} parent=1 // pred_check_branch
      %2507 = sbr.rel (0) target = $region45
    $region44: #{tpu_custom_call.1} parent=1 // pred_region
      _
    $region45: #{tpu_custom_call.1} parent=1 // pred_fallthru
      _
    // Predicated region
    $region46: #{tpu_custom_call.1} parent=1 // pred_check
      _
    $region47: #{tpu_custom_call.1} parent=1 // pred_check_branch
      %2509 = sbr.rel (0) target = $region49
    $region48: #{tpu_custom_call.1} parent=1 // pred_region
      _
    $region49: #{tpu_custom_call.1} parent=1 // pred_fallthru
      _
    %2510 = vsyncpa [#allocation3], 1

</llo_original>
